<compile_context>
chip_gen: v5e
topology: v5e:2x2
jax: 0.10.0
libtpu: 0.0.40
codegen_flags: <defaults>
</compile_context>

<pallas_src>
import itertools
import math

import jax
import jax.numpy as jnp
from jax import lax
from jax.experimental import pallas as pl
from jax.experimental.pallas import tpu as pltpu

# ---------------- config (small, consistent with the module) ----------------
HIDDEN = 32          # hidden_sizes
KEY_DIM = 16         # key_dim
NUM_HEADS = 2        # num_attention_heads
ATTN_RATIO = 2       # attention_ratio
RESOLUTION = 4       # resolution -> seq_len = 16
BATCH = 16           # enough images to fill two rows=128 grid steps

SEQ = RESOLUTION * RESOLUTION                 # 16
V_DIM = ATTN_RATIO * KEY_DIM                  # 32  (per-head value width)
PER_HEAD = 2 * KEY_DIM + V_DIM                # 64  (q + k + v per head)
OUT_KV = NUM_HEADS * PER_HEAD                 # 128 (out_dim_keys_values)
OUT_PROJ = NUM_HEADS * V_DIM                  # 64  (out_dim_projection)
SCALE = KEY_DIM ** (-0.5)
BN_EPS = 1e-5

OUT_PAD = 128                                 # lane-dense output width
MAX_BATCH_TILE = 8                            # rows = 8*16 = 128 per grid step
NEG_BIAS = -1e9                               # cross-image attention mask


# ---------------------------- Pallas kernel ---------------------------------
def levit_attention_kernel(x_ref, wqkv_ref, bqkv_ref, bias_ref,
                           wproj_ref, bproj_ref, o_ref):
    # x_ref: (rows, HIDDEN) bf16 with rows = batch_tile * SEQ (batch*seq
    # flattened in the wrapper).  No reshapes / transposes in the kernel.
    rows = x_ref.shape[0]

    # One fused, 128-lane-dense QKV projection (bf16 operands, f32 accumulate).
    # SCALE is already folded into the q columns of wqkv / bqkv.
    qkv = jnp.dot(x_ref[...], wqkv_ref[...],
                  preferred_element_type=jnp.float32) + bqkv_ref[...]
    qkv_bf = qkv.astype(jnp.bfloat16)          # matmul operands in bf16

    acc = jnp.zeros((rows, OUT_PAD), dtype=jnp.float32)
    for h in range(NUM_HEADS):                 # static unroll over heads
        base = h * PER_HEAD
        q = qkv_bf[:, base:base + KEY_DIM]                     # (rows, 16)
        k = qkv_bf[:, base + KEY_DIM:base + 2 * KEY_DIM]       # (rows, 16)
        v = qkv_bf[:, base + 2 * KEY_DIM:base + PER_HEAD]      # (rows, 32)

        # q @ k^T without materializing a transpose of k: contract last dims.
        # bias_ref[h] is block-diagonal: real relative-position bias on
        # same-image blocks, -1e9 across images (exp underflows to exactly 0).
        s = lax.dot_general(q, k, (((1,), (1,)), ((), ())),
                            preferred_element_type=jnp.float32)
        s = s + bias_ref[h]
        s = s - jnp.max(s, axis=-1, keepdims=True)
        p = jnp.exp(s)
        p = p * pl.reciprocal(jnp.sum(p, axis=-1, keepdims=True), approx=True)

        ctx = jnp.dot(p.astype(jnp.bfloat16), v,
                      preferred_element_type=jnp.float32)      # (rows, V_DIM)
        hs = ctx * jnp.clip(ctx + 3.0, 0.0, 6.0) * (1.0 / 6.0)  # Hardswish, f32
        # Per-head projection accumulation (lane-dense 128-wide output).
        acc = acc + jnp.dot(hs.astype(jnp.bfloat16), wproj_ref[h],
                            preferred_element_type=jnp.float32)

    o_ref[...] = (acc + bproj_ref[...]).astype(o_ref.dtype)


# ---------------------- one-time parameter preparation ----------------------
def choose_batch_tile(batch):
    # Target rows = bt*SEQ ~ 128 per grid step, but keep nb >= 2 grid steps so
    # the pipeline has something to overlap and v7x can use both TensorCores.
    return max(1, min(MAX_BATCH_TILE, -(-batch // 2)))


def prepare_attention_params(wqkv_eff, bqkv_eff, attn_bias,
                             wproj_eff, bproj_eff, bt):
    """All static transforms, done once per (model, batch-tile)."""
    rows = bt * SEQ

    # Fold SCALE into the q columns of the fused qkv weight / bias.
    head_scale = jnp.concatenate(
        [jnp.full((KEY_DIM,), SCALE, jnp.float32),
         jnp.ones((KEY_DIM + V_DIM,), jnp.float32)])
    col_scale = jnp.tile(head_scale, (NUM_HEADS,))            # (OUT_KV,)
    wqkv = (wqkv_eff * col_scale[None, :]).astype(jnp.bfloat16)   # (HIDDEN, 128)
    bqkv = (bqkv_eff * col_scale[None, :]).astype(jnp.float32)    # (1, 128)

    # Per-head projection weights, zero-padded to a 128-lane-dense output.
    wproj_heads = jnp.stack(
        [wproj_eff[h * V_DIM:(h + 1) * V_DIM] for h in range(NUM_HEADS)])
    wproj = jnp.pad(wproj_heads,
                    ((0, 0), (0, 0), (0, OUT_PAD - HIDDEN))).astype(jnp.bfloat16)
    bproj = jnp.pad(bproj_eff,
                    ((0, 0), (0, OUT_PAD - HIDDEN))).astype(jnp.float32)

    # Block-diagonal attention bias for a batch tile (built ONCE, not per call).
    blk = jnp.kron(jnp.eye(bt, dtype=jnp.float32),
                   jnp.ones((SEQ, SEQ), jnp.float32))          # (rows, rows)
    bias_big = jnp.where(blk[None] > 0,
                         jnp.tile(attn_bias.astype(jnp.float32), (1, bt, bt)),
                         jnp.float32(NEG_BIAS))                # (H, rows, rows)

    return dict(bt=bt, rows=rows, wqkv=wqkv, bqkv=bqkv,
                bias=bias_big, wproj=wproj, bproj=bproj)


# ------------------------------- forward -------------------------------------
def levit_attention_pallas(x, params):
    B, seq, hidden = x.shape
    assert seq == SEQ and hidden == HIDDEN
    bt, rows = params["bt"], params["rows"]

    nb = -(-B // bt)                     # grid steps (>= 2 for B >= 2)
    b_pad = nb * bt

    # ---- wrapper-side layout plumbing ----
    x_flat = x.reshape(B * SEQ, HIDDEN)
    if b_pad != B:
        x_flat = jnp.pad(x_flat, ((0, (b_pad - B) * SEQ), (0, 0)))
    x_flat = x_flat.astype(jnp.bfloat16)

    # ---- cost estimate (advisory) ----
    flops = nb * (2 * rows * HIDDEN * OUT_KV
                  + NUM_HEADS * (2 * rows * rows * KEY_DIM
                                 + 2 * rows * rows * V_DIM
                                 + 2 * rows * V_DIM * OUT_PAD))
    transcendentals = nb * NUM_HEADS * (rows * rows + rows)
    bytes_accessed = (2 * x_flat.size + 2 * params["wqkv"].size
                      + 4 * params["bqkv"].size + 4 * params["bias"].size
                      + 2 * params["wproj"].size + 4 * params["bproj"].size
                      + 4 * b_pad * SEQ * OUT_PAD)

    out_flat = pl.pallas_call(
        levit_attention_kernel,
        out_shape=jax.ShapeDtypeStruct((b_pad * SEQ, OUT_PAD), jnp.float32),
        grid_spec=pltpu.PrefetchScalarGridSpec(
            num_scalar_prefetch=0,
            grid=(nb,),
            in_specs=[
                pl.BlockSpec((rows, HIDDEN), lambda i: (i, 0)),
                pl.BlockSpec((HIDDEN, OUT_KV), lambda i: (0, 0)),
                pl.BlockSpec((1, OUT_KV), lambda i: (0, 0)),
                pl.BlockSpec((NUM_HEADS, rows, rows), lambda i: (0, 0, 0)),
                pl.BlockSpec((NUM_HEADS, V_DIM, OUT_PAD), lambda i: (0, 0, 0)),
                pl.BlockSpec((1, OUT_PAD), lambda i: (0, 0)),
            ],
            out_specs=pl.BlockSpec((rows, OUT_PAD), lambda i: (i, 0)),
        ),
        compiler_params=pltpu.CompilerParams(
            dimension_semantics=("parallel",)),
        cost_estimate=pl.CostEstimate(flops=flops,
                                      transcendentals=transcendentals,
                                      bytes_accessed=bytes_accessed),
    )(x_flat, params["wqkv"], params["bqkv"], params["bias"],
      params["wproj"], params["bproj"])

    # TODO(synk): in a full LevitEncoder the padded 128-lane output would be
    # consumed directly by the next folded MLP layer (zero weight rows for the
    # pad columns) instead of being sliced here.
    return out_flat[:B * SEQ, :HIDDEN].reshape(B, SEQ, HIDDEN)


# ----------------------------- glue / setup ---------------------------------
def fold_linear_bn(W, gamma, beta, mean, var, eps=BN_EPS):
    """Fold Linear(bias=False) + eval-mode BatchNorm1d into (W_eff, b_eff).

    y = BN(x @ W.T) = x @ W_eff + b_eff   with W_eff shape (in, out).
    """
    scale = gamma / jnp.sqrt(var + eps)
    W_eff = (W * scale[:, None]).T
    b_eff = beta - mean * scale
    return W_eff, b_eff.reshape(1, -1)


def build_attention_bias_index(resolution):
    points = list(itertools.product(range(resolution), range(resolution)))
    attention_offsets, indices = {}, []
    for p1 in points:
        for p2 in points:
            offset = (abs(p1[0] - p2[0]), abs(p1[1] - p2[1]))
            if offset not in attention_offsets:
                attention_offsets[offset] = len(attention_offsets)
            indices.append(attention_offsets[offset])
    n = len(points)
    idxs = jnp.array(indices, dtype=jnp.int32).reshape(n, n)
    return idxs, len(attention_offsets)


def reference_forward(x, wqkv_eff, bqkv_eff, attn_bias, wproj_eff, bproj_eff):
    """Faithful f32 re-implementation of LevitAttention.forward (eval mode)."""
    B, N, _ = x.shape
    qkv = x @ wqkv_eff + bqkv_eff[0]
    qkv = qkv.reshape(B, N, NUM_HEADS, PER_HEAD)
    q = qkv[..., :KEY_DIM].transpose(0, 2, 1, 3)
    k = qkv[..., KEY_DIM:2 * KEY_DIM].transpose(0, 2, 1, 3)
    v = qkv[..., 2 * KEY_DIM:].transpose(0, 2, 1, 3)
    attn = jnp.einsum("bhqd,bhkd->bhqk", q, k) * SCALE + attn_bias[None]
    attn = jax.nn.softmax(attn, axis=-1)
    ctx = jnp.einsum("bhqk,bhkd->bhqd", attn, v).transpose(0, 2, 1, 3)
    ctx = ctx.reshape(B, N, OUT_PROJ)
    hs = ctx * jnp.clip(ctx + 3.0, 0.0, 6.0) / 6.0
    return hs @ wproj_eff + bproj_eff[0]


if __name__ == "__main__":
    key = jax.random.PRNGKey(0)
    keys = jax.random.split(key, 12)

    # input
    x = jax.random.normal(keys[0], (BATCH, SEQ, HIDDEN), dtype=jnp.float32)

    # queries_keys_values: Linear(HIDDEN -> OUT_KV, bias=False) + BatchNorm1d(OUT_KV)
    W_qkv = jax.random.normal(keys[1], (OUT_KV, HIDDEN), dtype=jnp.float32) * 0.05
    g_qkv = 1.0 + 0.1 * jax.random.normal(keys[2], (OUT_KV,), dtype=jnp.float32)
    b_qkv = 0.1 * jax.random.normal(keys[3], (OUT_KV,), dtype=jnp.float32)
    m_qkv = 0.1 * jax.random.normal(keys[4], (OUT_KV,), dtype=jnp.float32)
    v_qkv = jnp.abs(1.0 + 0.1 * jax.random.normal(keys[5], (OUT_KV,), dtype=jnp.float32))

    # projection: Linear(OUT_PROJ -> HIDDEN, bias=False) + BatchNorm1d(HIDDEN)
    W_proj = jax.random.normal(keys[6], (HIDDEN, OUT_PROJ), dtype=jnp.float32) * 0.05
    g_proj = 1.0 + 0.1 * jax.random.normal(keys[7], (HIDDEN,), dtype=jnp.float32)
    b_proj = 0.1 * jax.random.normal(keys[8], (HIDDEN,), dtype=jnp.float32)
    m_proj = 0.1 * jax.random.normal(keys[9], (HIDDEN,), dtype=jnp.float32)
    v_proj = jnp.abs(1.0 + 0.1 * jax.random.normal(keys[10], (HIDDEN,), dtype=jnp.float32))

    # attention biases + relative-position index gather (constant per forward)
    idxs, n_offsets = build_attention_bias_index(RESOLUTION)
    attention_biases = 0.02 * jax.random.normal(
        keys[11], (NUM_HEADS, n_offsets), dtype=jnp.float32)
    attn_bias = attention_biases[:, idxs]                      # (H, SEQ, SEQ)

    # fold BatchNorm (eval mode, running stats) into the linear layers
    wqkv_eff, bqkv_eff = fold_linear_bn(W_qkv, g_qkv, b_qkv, m_qkv, v_qkv)
    wproj_eff, bproj_eff = fold_linear_bn(W_proj, g_proj, b_proj, m_proj, v_proj)

    # one-time parameter prep (SCALE fold, bf16 cast, padding, block-diag bias)
    bt = choose_batch_tile(BATCH)                              # 8 -> rows=128
    params = prepare_attention_params(
        wqkv_eff, bqkv_eff, attn_bias, wproj_eff, bproj_eff, bt)

    out = levit_attention_pallas(x, params)
    out = jax.block_until_ready(out)

    ref = reference_forward(x, wqkv_eff, bqkv_eff, attn_bias, wproj_eff, bproj_eff)
    assert out.shape == (BATCH, SEQ, HIDDEN)
    # Tolerance accounts for bf16 matmul operands (perf feedback) and the EUP
    # approximate reciprocal in the softmax; observed error is O(1e-3).
    assert jnp.allclose(out, ref, atol=2e-2, rtol=2e-2)

    print("KERNEL_OK")
</pallas_src>

<mosaic_0001>
module attributes {stable_mosaic.version = 11 : i64} {
  func.func @levit_attention_kernel(%arg0: i32, %arg1: memref<128x32xbf16, #tpu.memory_space<vmem>>, %arg2: memref<32x128xbf16, #tpu.memory_space<vmem>>, %arg3: memref<1x128xf32, #tpu.memory_space<vmem>>, %arg4: memref<2x128x128xf32, #tpu.memory_space<vmem>>, %arg5: memref<2x32x128xbf16, #tpu.memory_space<vmem>>, %arg6: memref<1x128xf32, #tpu.memory_space<vmem>>, %arg7: memref<128x128xf32, #tpu.memory_space<vmem>>) attributes {dimension_semantics = [#tpu.dimension_semantics<parallel>], iteration_bounds = array<i64: 2>, scalar_prefetch = 0 : i64, scratch_operands = 0 : i64, tpu.core_type = #tpu.core_type<tc>, window_params = [{transform_indices = @transform_0, window_bounds = array<i64: 128, 32>}, {pipeline_mode = #tpu.pipeline_mode<synchronous>, transform_indices = @transform_1, window_bounds = array<i64: 32, 128>}, {pipeline_mode = #tpu.pipeline_mode<synchronous>, transform_indices = @transform_2, window_bounds = array<i64: 1, 128>}, {pipeline_mode = #tpu.pipeline_mode<synchronous>, transform_indices = @transform_3, window_bounds = array<i64: 2, 128, 128>}, {pipeline_mode = #tpu.pipeline_mode<synchronous>, transform_indices = @transform_4, window_bounds = array<i64: 2, 32, 128>}, {pipeline_mode = #tpu.pipeline_mode<synchronous>, transform_indices = @transform_5, window_bounds = array<i64: 1, 128>}, {transform_indices = @transform_6, window_bounds = array<i64: 128, 128>}]} {
    %c0 = arith.constant 0 : index
    %c0_0 = arith.constant 0 : index
    %0 = vector.load %arg1[%c0, %c0_0] : memref<128x32xbf16, #tpu.memory_space<vmem>>, vector<128x32xbf16>
    %c0_1 = arith.constant 0 : index
    %c0_2 = arith.constant 0 : index
    %1 = vector.load %arg2[%c0_1, %c0_2] : memref<32x128xbf16, #tpu.memory_space<vmem>>, vector<32x128xbf16>
    %cst = arith.constant dense<0.000000e+00> : vector<128x128xf32>
    %2 = tpu.matmul %0, %1, %cst {dimension_numbers = #tpu.dot_dimension_numbers<[1], [0], [0], [1], [0, 0, 1, 1], [], []>} : vector<128x32xbf16>, vector<32x128xbf16>, vector<128x128xf32> -> vector<128x128xf32>
    %c0_3 = arith.constant 0 : index
    %c0_4 = arith.constant 0 : index
    %3 = vector.load %arg3[%c0_3, %c0_4] : memref<1x128xf32, #tpu.memory_space<vmem>>, vector<1x128xf32>
    %4 = vector.broadcast %3 : vector<1x128xf32> to vector<128x128xf32>
    %5 = arith.addf %2, %4 : vector<128x128xf32>
    %6 = arith.truncf %5 : vector<128x128xf32> to vector<128x128xbf16>
    %cst_5 = arith.constant 0.000000e+00 : f32
    %7 = vector.broadcast %cst_5 : f32 to vector<128x128xf32>
    %8 = vector.extract_strided_slice %6 {offsets = [0, 0], sizes = [128, 16], strides = [1, 1]} : vector<128x128xbf16> to vector<128x16xbf16>
    %9 = vector.extract_strided_slice %6 {offsets = [0, 16], sizes = [128, 16], strides = [1, 1]} : vector<128x128xbf16> to vector<128x16xbf16>
    %10 = vector.extract_strided_slice %6 {offsets = [0, 32], sizes = [128, 32], strides = [1, 1]} : vector<128x128xbf16> to vector<128x32xbf16>
    %cst_6 = arith.constant dense<0.000000e+00> : vector<128x128xf32>
    %11 = tpu.matmul %8, %9, %cst_6 {dimension_numbers = #tpu.dot_dimension_numbers<[1], [1], [0], [0], [0, 0, 1, 0], [], []>} : vector<128x16xbf16>, vector<128x16xbf16>, vector<128x128xf32> -> vector<128x128xf32>
    %c0_7 = arith.constant 0 : index
    %c0_8 = arith.constant 0 : index
    %c0_9 = arith.constant 0 : index
    %12 = vector.load %arg4[%c0_7, %c0_8, %c0_9] : memref<2x128x128xf32, #tpu.memory_space<vmem>>, vector<1x128x128xf32>
    %13 = vector.shape_cast %12 : vector<1x128x128xf32> to vector<128x128xf32>
    %14 = arith.addf %11, %13 : vector<128x128xf32>
    %cst_10 = arith.constant dense<0xFF800000> : vector<128xf32>
    %15 = vector.multi_reduction <maximumf>, %14, %cst_10 [1] : vector<128x128xf32> to vector<128xf32>
    %16 = vector.shape_cast %15 : vector<128xf32> to vector<128x1xf32>
    %17 = vector.broadcast %16 : vector<128x1xf32> to vector<128x128xf32>
    %18 = arith.subf %14, %17 : vector<128x128xf32>
    %19 = math.exp %18 : vector<128x128xf32>
    %cst_11 = arith.constant dense<0.000000e+00> : vector<128xf32>
    %20 = vector.multi_reduction <add>, %19, %cst_11 [1] : vector<128x128xf32> to vector<128xf32>
    %21 = vector.shape_cast %20 : vector<128xf32> to vector<128x1xf32>
    %22 = tpu.reciprocal %21 {approx = true} : vector<128x1xf32> -> vector<128x1xf32>
    %23 = vector.broadcast %22 : vector<128x1xf32> to vector<128x128xf32>
    %24 = arith.mulf %19, %23 : vector<128x128xf32>
    %25 = arith.truncf %24 : vector<128x128xf32> to vector<128x128xbf16>
    %cst_12 = arith.constant dense<0.000000e+00> : vector<128x32xf32>
    %26 = tpu.matmul %25, %10, %cst_12 {dimension_numbers = #tpu.dot_dimension_numbers<[1], [0], [0], [1], [0, 0, 1, 1], [], []>} : vector<128x128xbf16>, vector<128x32xbf16>, vector<128x32xf32> -> vector<128x32xf32>
    %cst_13 = arith.constant 3.000000e+00 : f32
    %27 = vector.broadcast %cst_13 : f32 to vector<128x32xf32>
    %28 = arith.addf %26, %27 : vector<128x32xf32>
    %cst_14 = arith.constant 0.000000e+00 : f32
    %cst_15 = arith.constant 6.000000e+00 : f32
    %29 = vector.broadcast %cst_14 : f32 to vector<128x32xf32>
    %30 = arith.maximumf %29, %28 : vector<128x32xf32>
    %31 = vector.broadcast %cst_15 : f32 to vector<128x32xf32>
    %32 = arith.minimumf %31, %30 : vector<128x32xf32>
    %33 = arith.mulf %26, %32 : vector<128x32xf32>
    %cst_16 = arith.constant 0.166666672 : f32
    %34 = vector.broadcast %cst_16 : f32 to vector<128x32xf32>
    %35 = arith.mulf %33, %34 : vector<128x32xf32>
    %36 = arith.truncf %35 : vector<128x32xf32> to vector<128x32xbf16>
    %c0_17 = arith.constant 0 : index
    %c0_18 = arith.constant 0 : index
    %c0_19 = arith.constant 0 : index
    %37 = vector.load %arg5[%c0_17, %c0_18, %c0_19] : memref<2x32x128xbf16, #tpu.memory_space<vmem>>, vector<1x32x128xbf16>
    %38 = vector.shape_cast %37 : vector<1x32x128xbf16> to vector<32x128xbf16>
    %cst_20 = arith.constant dense<0.000000e+00> : vector<128x128xf32>
    %39 = tpu.matmul %36, %38, %cst_20 {dimension_numbers = #tpu.dot_dimension_numbers<[1], [0], [0], [1], [0, 0, 1, 1], [], []>} : vector<128x32xbf16>, vector<32x128xbf16>, vector<128x128xf32> -> vector<128x128xf32>
    %40 = arith.addf %7, %39 : vector<128x128xf32>
    %41 = vector.extract_strided_slice %6 {offsets = [0, 64], sizes = [128, 16], strides = [1, 1]} : vector<128x128xbf16> to vector<128x16xbf16>
    %42 = vector.extract_strided_slice %6 {offsets = [0, 80], sizes = [128, 16], strides = [1, 1]} : vector<128x128xbf16> to vector<128x16xbf16>
    %43 = vector.extract_strided_slice %6 {offsets = [0, 96], sizes = [128, 32], strides = [1, 1]} : vector<128x128xbf16> to vector<128x32xbf16>
    %cst_21 = arith.constant dense<0.000000e+00> : vector<128x128xf32>
    %44 = tpu.matmul %41, %42, %cst_21 {dimension_numbers = #tpu.dot_dimension_numbers<[1], [1], [0], [0], [0, 0, 1, 0], [], []>} : vector<128x16xbf16>, vector<128x16xbf16>, vector<128x128xf32> -> vector<128x128xf32>
    %c1 = arith.constant 1 : index
    %c0_22 = arith.constant 0 : index
    %c0_23 = arith.constant 0 : index
    %45 = vector.load %arg4[%c1, %c0_22, %c0_23] : memref<2x128x128xf32, #tpu.memory_space<vmem>>, vector<1x128x128xf32>
    %46 = vector.shape_cast %45 : vector<1x128x128xf32> to vector<128x128xf32>
    %47 = arith.addf %44, %46 : vector<128x128xf32>
    %cst_24 = arith.constant dense<0xFF800000> : vector<128xf32>
    %48 = vector.multi_reduction <maximumf>, %47, %cst_24 [1] : vector<128x128xf32> to vector<128xf32>
    %49 = vector.shape_cast %48 : vector<128xf32> to vector<128x1xf32>
    %50 = vector.broadcast %49 : vector<128x1xf32> to vector<128x128xf32>
    %51 = arith.subf %47, %50 : vector<128x128xf32>
    %52 = math.exp %51 : vector<128x128xf32>
    %cst_25 = arith.constant dense<0.000000e+00> : vector<128xf32>
    %53 = vector.multi_reduction <add>, %52, %cst_25 [1] : vector<128x128xf32> to vector<128xf32>
    %54 = vector.shape_cast %53 : vector<128xf32> to vector<128x1xf32>
    %55 = tpu.reciprocal %54 {approx = true} : vector<128x1xf32> -> vector<128x1xf32>
    %56 = vector.broadcast %55 : vector<128x1xf32> to vector<128x128xf32>
    %57 = arith.mulf %52, %56 : vector<128x128xf32>
    %58 = arith.truncf %57 : vector<128x128xf32> to vector<128x128xbf16>
    %cst_26 = arith.constant dense<0.000000e+00> : vector<128x32xf32>
    %59 = tpu.matmul %58, %43, %cst_26 {dimension_numbers = #tpu.dot_dimension_numbers<[1], [0], [0], [1], [0, 0, 1, 1], [], []>} : vector<128x128xbf16>, vector<128x32xbf16>, vector<128x32xf32> -> vector<128x32xf32>
    %cst_27 = arith.constant 3.000000e+00 : f32
    %60 = vector.broadcast %cst_27 : f32 to vector<128x32xf32>
    %61 = arith.addf %59, %60 : vector<128x32xf32>
    %cst_28 = arith.constant 0.000000e+00 : f32
    %cst_29 = arith.constant 6.000000e+00 : f32
    %62 = vector.broadcast %cst_28 : f32 to vector<128x32xf32>
    %63 = arith.maximumf %62, %61 : vector<128x32xf32>
    %64 = vector.broadcast %cst_29 : f32 to vector<128x32xf32>
    %65 = arith.minimumf %64, %63 : vector<128x32xf32>
    %66 = arith.mulf %59, %65 : vector<128x32xf32>
    %cst_30 = arith.constant 0.166666672 : f32
    %67 = vector.broadcast %cst_30 : f32 to vector<128x32xf32>
    %68 = arith.mulf %66, %67 : vector<128x32xf32>
    %69 = arith.truncf %68 : vector<128x32xf32> to vector<128x32xbf16>
    %c1_31 = arith.constant 1 : index
    %c0_32 = arith.constant 0 : index
    %c0_33 = arith.constant 0 : index
    %70 = vector.load %arg5[%c1_31, %c0_32, %c0_33] : memref<2x32x128xbf16, #tpu.memory_space<vmem>>, vector<1x32x128xbf16>
    %71 = vector.shape_cast %70 : vector<1x32x128xbf16> to vector<32x128xbf16>
    %cst_34 = arith.constant dense<0.000000e+00> : vector<128x128xf32>
    %72 = tpu.matmul %69, %71, %cst_34 {dimension_numbers = #tpu.dot_dimension_numbers<[1], [0], [0], [1], [0, 0, 1, 1], [], []>} : vector<128x32xbf16>, vector<32x128xbf16>, vector<128x128xf32> -> vector<128x128xf32>
    %73 = arith.addf %40, %72 : vector<128x128xf32>
    %c0_35 = arith.constant 0 : index
    %c0_36 = arith.constant 0 : index
    %74 = vector.load %arg6[%c0_35, %c0_36] : memref<1x128xf32, #tpu.memory_space<vmem>>, vector<1x128xf32>
    %75 = vector.broadcast %74 : vector<1x128xf32> to vector<128x128xf32>
    %76 = arith.addf %73, %75 : vector<128x128xf32>
    %c0_37 = arith.constant 0 : index
    %c0_38 = arith.constant 0 : index
    %77 = vector.load %arg7[%c0_37, %c0_38] : memref<128x128xf32, #tpu.memory_space<vmem>>, vector<128x128xf32>
    tpu.vector_store %arg7[%c0_37, %c0_38], %76 {strides = array<i32>} : memref<128x128xf32, #tpu.memory_space<vmem>>, vector<128x128xf32>,
    return
  }
  func.func @transform_0(%arg0: i32) -> (i32, i32) {
    %c0_i32 = arith.constant 0 : i32
    %c0_i32_0 = arith.constant 0 : i32
    return %arg0, %c0_i32 : i32, i32
  }
  func.func @transform_1(%arg0: i32) -> (i32, i32) {
    %c0_i32 = arith.constant 0 : i32
    %c0_i32_0 = arith.constant 0 : i32
    %c0_i32_1 = arith.constant 0 : i32
    return %c0_i32, %c0_i32_0 : i32, i32
  }
  func.func @transform_2(%arg0: i32) -> (i32, i32) {
    %c0_i32 = arith.constant 0 : i32
    %c0_i32_0 = arith.constant 0 : i32
    %c0_i32_1 = arith.constant 0 : i32
    return %c0_i32, %c0_i32_0 : i32, i32
  }
  func.func @transform_3(%arg0: i32) -> (i32, i32, i32) {
    %c0_i32 = arith.constant 0 : i32
    %c0_i32_0 = arith.constant 0 : i32
    %c0_i32_1 = arith.constant 0 : i32
    %c0_i32_2 = arith.constant 0 : i32
    return %c0_i32, %c0_i32_0, %c0_i32_1 : i32, i32, i32
  }
  func.func @transform_4(%arg0: i32) -> (i32, i32, i32) {
    %c0_i32 = arith.constant 0 : i32
    %c0_i32_0 = arith.constant 0 : i32
    %c0_i32_1 = arith.constant 0 : i32
    %c0_i32_2 = arith.constant 0 : i32
    return %c0_i32, %c0_i32_0, %c0_i32_1 : i32, i32, i32
  }
  func.func @transform_5(%arg0: i32) -> (i32, i32) {
    %c0_i32 = arith.constant 0 : i32
    %c0_i32_0 = arith.constant 0 : i32
    %c0_i32_1 = arith.constant 0 : i32
    return %c0_i32, %c0_i32_0 : i32, i32
  }
  func.func @transform_6(%arg0: i32) -> (i32, i32) {
    %c0_i32 = arith.constant 0 : i32
    %c0_i32_0 = arith.constant 0 : i32
    return %arg0, %c0_i32 : i32, i32
  }
}

</mosaic_0001>

<llo_original>
// kernel: tpu_custom_call.1
$region0: #{tpu_custom_call.1}
  #allocation0 [shape = 'u32[]', space=smem, size = 0x4, offset = 0x4, fixed_abs, tag = 'smem constant byte address 0x4 - core index']
  #allocation1 [shape = 'u32[72,128]{1,0:T(1,128)}', space=vmem, size = 0x9000, scoped, tag = 'internal scratch']
  %s0 = inlined_call_operand.vmem [shape: bf16[256,32], index: 0, kind: input, shape index: {}]
  %s1 = inlined_call_operand.vmem [shape: bf16[32,128], index: 1, kind: input, shape index: {}]
  %s2 = inlined_call_operand.vmem [shape: f32[1,128], index: 2, kind: input, shape index: {}]
  %s3 = inlined_call_operand.hbm [shape: f32[2,128,128], index: 3, kind: input, shape index: {}]
  %s4 = inlined_call_operand.vmem [shape: bf16[2,32,128], index: 4, kind: input, shape index: {}]
  %s5 = inlined_call_operand.vmem [shape: f32[1,128], index: 5, kind: input, shape index: {}]
  %s6 = inlined_call_operand.hbm [shape: f32[256,128], index: 6, kind: output, shape index: {}]
  %s7 = sld [smem:[#allocation0]]
  $region61: #{tpu_custom_call.1} parent=0
    _
  %s9 = ssub.s32 1, %s7
  %s10 = scalar_select 0, %s9, %s7
  $region1: #{tpu_custom_call.1} parent=0
    #allocation2 [shape = 'u8[131072]{0}', space=vmem, size = 0x20000, scoped, tag = 'input window, operand 3, single buffered']
    #allocation3 [shape = 's32[2]{0}', space=sflag, size = 0x8, scoped, tag = 'scoped memory for tpu_custom_call.1']
    #allocation4 [shape = 's32[2]{0}', space=sflag, size = 0x8, scoped, tag = 'scoped memory for tpu_custom_call.1']
    #allocation5 [shape = 'u8[131072]{0}', space=vmem, size = 0x20000, scoped, tag = 'output window, operand 0']
    %11 = vsyncpa [#allocation3], 0
    %12 = vsyncpa [#allocation4], 0
    %s13 = scalar_lea.sflag [#allocation4], 1
    %14 = vsyncpa %s13, 0
    loop: start=0, step=1, limit=4
    $region2: #{tpu_custom_call.1} parent=1 // loop_pre_header
      _
    $region3: #{tpu_custom_call.1} parent=1 // loop_header
      %s16 = sphi 0, %s20
      %p17 = scmp.ge.s32.totalorder %s16, 4
      %s26 = sphi 0, %s28
      %s29 = sphi 0, %s26
      %s30 = sphi 0, %s29
      %s46 = sphi 0, %s30
      %s50 = sphi 0, %s50
      %s52 = sphi 0, %s50
      %s53 = sphi 0, %s52
      %s67 = sphi 0, %s53
      %s71 = sphi 0, %s71
      %s73 = sphi 0, %s71
      %s74 = sphi 0, %s73
      %s88 = sphi 0, %s74
      %s92 = sphi 0, %s92
      %s94 = sphi 0, %s92
      %s95 = sphi 0, %s94
      %s109 = sphi 0, %s95
      %s113 = sphi 0, %s113
      %s115 = sphi 0, %s113
      %s116 = sphi 0, %s115
      %s130 = sphi 0, %s116
      %s134 = sphi 0, %s134
      %s136 = sphi 0, %s134
      %s137 = sphi 0, %s136
      %s151 = sphi 0, %s137
      %s157 = sphi 0, %s159
      %s160 = sphi 0, %s157
      %s161 = sphi 0, %s160
      %s177 = sphi 0, %s161
    $region4: #{tpu_custom_call.1} parent=1 // loop_header_branch
      %19 = sbr.rel (%p17) target = $region8
    $region5: #{tpu_custom_call.1} parent=1 // loop_body
      %s21 = ssub.s32 %s16, 1
      %s22 = ssub.s32 %s16, 2
      %s23 = sadd.s32 %s16, 1
      %s24 = ssub.s32 %s16, %s23
      %p25 = scmp.eq.s32.totalorder %s24, 0
      %s27 = sadd.s32 %s26, 1
      %s28 = scalar_select %p25, %s26, %s27
      %p31 = pneg %p25
      %p32 = scmp.eq.s32.totalorder %s16, 1
      %p33 = por %p31, %p32
      %p34 = scmp.ne.s32.totalorder %s26, %s29
      %p35 = scmp.eq.s32.totalorder %s16, 0
      %p36 = por %p34, %p35
      %p37 = scmp.ne.s32.totalorder %s26, %s29
      %p38 = scmp.eq.s32.totalorder %s21, 1
      %p39 = por %p37, %p38
      %p40 = scmp.ne.s32.totalorder %s29, %s30
      %p41 = scmp.eq.s32.totalorder %s21, 0
      %p42 = por %p40, %p41
      %p43 = scmp.ne.s32.totalorder %s29, %s30
      %p44 = scmp.eq.s32.totalorder %s22, 1
      %p45 = por %p43, %p44
      %p47 = scmp.ne.s32.totalorder %s30, %s46
      %p48 = scmp.eq.s32.totalorder %s22, 0
      %p49 = por %p47, %p48
      %s51 = sadd.s32 %s50, 1
      %p54 = scmp.eq.s32.totalorder %s16, 1
      %p55 = scmp.ne.s32.totalorder %s50, %s52
      %p56 = scmp.eq.s32.totalorder %s16, 0
      %p57 = por %p55, %p56
      %p58 = scmp.ne.s32.totalorder %s50, %s52
      %p59 = scmp.eq.s32.totalorder %s21, 1
      %p60 = por %p58, %p59
      %p61 = scmp.ne.s32.totalorder %s52, %s53
      %p62 = scmp.eq.s32.totalorder %s21, 0
      %p63 = por %p61, %p62
      %p64 = scmp.ne.s32.totalorder %s52, %s53
      %p65 = scmp.eq.s32.totalorder %s22, 1
      %p66 = por %p64, %p65
      %p68 = scmp.ne.s32.totalorder %s53, %s67
      %p69 = scmp.eq.s32.totalorder %s22, 0
      %p70 = por %p68, %p69
      %s72 = sadd.s32 %s71, 1
      %p75 = scmp.eq.s32.totalorder %s16, 1
      %p76 = scmp.ne.s32.totalorder %s71, %s73
      %p77 = scmp.eq.s32.totalorder %s16, 0
      %p78 = por %p76, %p77
      %p79 = scmp.ne.s32.totalorder %s71, %s73
      %p80 = scmp.eq.s32.totalorder %s21, 1
      %p81 = por %p79, %p80
      %p82 = scmp.ne.s32.totalorder %s73, %s74
      %p83 = scmp.eq.s32.totalorder %s21, 0
      %p84 = por %p82, %p83
      %p85 = scmp.ne.s32.totalorder %s73, %s74
      %p86 = scmp.eq.s32.totalorder %s22, 1
      %p87 = por %p85, %p86
      %p89 = scmp.ne.s32.totalorder %s74, %s88
      %p90 = scmp.eq.s32.totalorder %s22, 0
      %p91 = por %p89, %p90
      %s93 = sadd.s32 %s92, 1
      %p96 = scmp.eq.s32.totalorder %s16, 1
      %p97 = scmp.ne.s32.totalorder %s92, %s94
      %p98 = scmp.eq.s32.totalorder %s16, 0
      %p99 = por %p97, %p98
      %p100 = scmp.ne.s32.totalorder %s92, %s94
      %p101 = scmp.eq.s32.totalorder %s21, 1
      %p102 = por %p100, %p101
      %p103 = scmp.ne.s32.totalorder %s94, %s95
      %p104 = scmp.eq.s32.totalorder %s21, 0
      %p105 = por %p103, %p104
      %p106 = scmp.ne.s32.totalorder %s94, %s95
      %p107 = scmp.eq.s32.totalorder %s22, 1
      %p108 = por %p106, %p107
      %p110 = scmp.ne.s32.totalorder %s95, %s109
      %p111 = scmp.eq.s32.totalorder %s22, 0
      %p112 = por %p110, %p111
      %s114 = sadd.s32 %s113, 1
      %p117 = scmp.eq.s32.totalorder %s16, 1
      %p118 = scmp.ne.s32.totalorder %s113, %s115
      %p119 = scmp.eq.s32.totalorder %s16, 0
      %p120 = por %p118, %p119
      %p121 = scmp.ne.s32.totalorder %s113, %s115
      %p122 = scmp.eq.s32.totalorder %s21, 1
      %p123 = por %p121, %p122
      %p124 = scmp.ne.s32.totalorder %s115, %s116
      %p125 = scmp.eq.s32.totalorder %s21, 0
      %p126 = por %p124, %p125
      %p127 = scmp.ne.s32.totalorder %s115, %s116
      %p128 = scmp.eq.s32.totalorder %s22, 1
      %p129 = por %p127, %p128
      %p131 = scmp.ne.s32.totalorder %s116, %s130
      %p132 = scmp.eq.s32.totalorder %s22, 0
      %p133 = por %p131, %p132
      %s135 = sadd.s32 %s134, 1
      %p138 = scmp.eq.s32.totalorder %s16, 1
      %p139 = scmp.ne.s32.totalorder %s134, %s136
      %p140 = scmp.eq.s32.totalorder %s16, 0
      %p141 = por %p139, %p140
      %p142 = scmp.ne.s32.totalorder %s134, %s136
      %p143 = scmp.eq.s32.totalorder %s21, 1
      %p144 = por %p142, %p143
      %p145 = scmp.ne.s32.totalorder %s136, %s137
      %p146 = scmp.eq.s32.totalorder %s21, 0
      %p147 = por %p145, %p146
      %p148 = scmp.ne.s32.totalorder %s136, %s137
      %p149 = scmp.eq.s32.totalorder %s22, 1
      %p150 = por %p148, %p149
      %p152 = scmp.ne.s32.totalorder %s137, %s151
      %p153 = scmp.eq.s32.totalorder %s22, 0
      %p154 = por %p152, %p153
      %s155 = ssub.s32 %s16, %s23
      %p156 = scmp.eq.s32.totalorder %s155, 0
      %s158 = sadd.s32 %s157, 1
      %s159 = scalar_select %p156, %s157, %s158
      %p162 = pneg %p156
      %p163 = scmp.eq.s32.totalorder %s16, 1
      %p164 = por %p162, %p163
      %p165 = scmp.ne.s32.totalorder %s157, %s160
      %p166 = scmp.eq.s32.totalorder %s16, 0
      %p167 = por %p165, %p166
      %p168 = scmp.ne.s32.totalorder %s157, %s160
      %p169 = scmp.eq.s32.totalorder %s21, 1
      %p170 = por %p168, %p169
      %p171 = scmp.ne.s32.totalorder %s160, %s161
      %p172 = scmp.eq.s32.totalorder %s21, 0
      %p173 = por %p171, %p172
      %p174 = scmp.ne.s32.totalorder %s160, %s161
      %p175 = scmp.eq.s32.totalorder %s22, 1
      %p176 = por %p174, %p175
      %p178 = scmp.ne.s32.totalorder %s161, %s177
      %p179 = scmp.eq.s32.totalorder %s22, 0
      %p180 = por %p178, %p179
      %p181 = scmp.le.s32.totalorder 1, %s16
      %p182 = scmp.lt.s32.totalorder %s16, 3
      %p183 = pnand %p181, %p182
      %p184 = pneg %p183
      // Predicated region
      $region9: #{tpu_custom_call.1} parent=5 // pred_check
        _
      $region10: #{tpu_custom_call.1} parent=5 // pred_check_branch
        %186 = sbr.rel (%p183) target = $region12
      $region11: #{tpu_custom_call.1} parent=5 // pred_region
        %s187 = ssub.s32 %s16, 1
        // Predicated region
        $region13: #{tpu_custom_call.1} parent=11 // pred_check
          %p188 = pneg %p63
        $region14: #{tpu_custom_call.1} parent=11 // pred_check_branch
          %190 = sbr.rel (%p188) target = $region16
        $region15: #{tpu_custom_call.1} parent=11 // pred_region
          _
        $region16: #{tpu_custom_call.1} parent=11 // pred_fallthru
          _
        // Predicated region
        $region17: #{tpu_custom_call.1} parent=11 // pred_check
          %p191 = pneg %p84
        $region18: #{tpu_custom_call.1} parent=11 // pred_check_branch
          %193 = sbr.rel (%p191) target = $region20
        $region19: #{tpu_custom_call.1} parent=11 // pred_region
          _
        $region20: #{tpu_custom_call.1} parent=11 // pred_fallthru
          _
        // Predicated region
        $region21: #{tpu_custom_call.1} parent=11 // pred_check
          %p194 = pneg %p105
        $region22: #{tpu_custom_call.1} parent=11 // pred_check_branch
          %196 = sbr.rel (%p194) target = $region24
        $region23: #{tpu_custom_call.1} parent=11 // pred_region
          %198 = vsyncadd [#allocation3], 0
          %s199 = sshll.u32 %s3, 4
          %s200 = int_to_ptr.hbm [resolvable:$true] %s199
          %s201 = sshll.u32 [#allocation2], 4
          %s202 = int_to_ptr.vmem [resolvable:$true] %s201
          %207 = dma.hbm_to_vmem [thread:$0]  %s200, 4096, %s202, [#allocation3], 128, 128, 8
        $region24: #{tpu_custom_call.1} parent=11 // pred_fallthru
          _
        // Predicated region
        $region25: #{tpu_custom_call.1} parent=11 // pred_check
          %p208 = pneg %p126
        $region26: #{tpu_custom_call.1} parent=11 // pred_check_branch
          %210 = sbr.rel (%p208) target = $region28
        $region27: #{tpu_custom_call.1} parent=11 // pred_region
          _
        $region28: #{tpu_custom_call.1} parent=11 // pred_fallthru
          _
        // Predicated region
        $region29: #{tpu_custom_call.1} parent=11 // pred_check
          %p211 = pneg %p147
        $region30: #{tpu_custom_call.1} parent=11 // pred_check_branch
          %213 = sbr.rel (%p211) target = $region32
        $region31: #{tpu_custom_call.1} parent=11 // pred_region
          _
        $region32: #{tpu_custom_call.1} parent=11 // pred_fallthru
          _
      $region12: #{tpu_custom_call.1} parent=5 // pred_fallthru
        _
      %p214 = scmp.lt.s32.totalorder %s16, 2
      // Predicated region
      $region33: #{tpu_custom_call.1} parent=5 // pred_check
        %p215 = pneg %p214
      $region34: #{tpu_custom_call.1} parent=5 // pred_check_branch
        %217 = sbr.rel (%p215) target = $region36
      $region35: #{tpu_custom_call.1} parent=5 // pred_region
        // Predicated region
        $region37: #{tpu_custom_call.1} parent=35 // pred_check
          %p218 = pneg %p36
        $region38: #{tpu_custom_call.1} parent=35 // pred_check_branch
          %220 = sbr.rel (%p218) target = $region40
        $region39: #{tpu_custom_call.1} parent=35 // pred_region
          %s221 = smul.u32 16, %s16
          %p222 = scmp.lt.s32.totalorder %s221, 31
          %s223 = scalar_select %p222, %s221, 31
          %s224 = smul.addr %s223, 4
          %s225 = scalar_lea.vmem %s0, %s224
          %s226 = smul.u32 16, %s16
        $region40: #{tpu_custom_call.1} parent=35 // pred_fallthru
          _
      $region36: #{tpu_custom_call.1} parent=5 // pred_fallthru
        _
      %p227 = scmp.le.s32.totalorder 1, %s16
      %p228 = scmp.lt.s32.totalorder %s16, 3
      %p229 = pnand %p227, %p228
      %p230 = pneg %p229
      // Predicated region
      $region41: #{tpu_custom_call.1} parent=5 // pred_check
        _
      $region42: #{tpu_custom_call.1} parent=5 // pred_check_branch
        %232 = sbr.rel (%p229) target = $region44
      $region43: #{tpu_custom_call.1} parent=5 // pred_region
        %s233 = ssub.s32 %s16, 1
        // Predicated region
        $region45: #{tpu_custom_call.1} parent=43 // pred_check
          %p234 = pneg %p105
        $region46: #{tpu_custom_call.1} parent=43 // pred_check_branch
          %236 = sbr.rel (%p234) target = $region48
        $region47: #{tpu_custom_call.1} parent=43 // pred_region
          %238 = dma.done [#allocation3], 4096
        $region48: #{tpu_custom_call.1} parent=43 // pred_fallthru
          _
        %s239 = smul.u32 16, %s21
        %p240 = scmp.lt.s32.totalorder %s239, 31
        %s241 = scalar_select %p240, %s239, 31
        %s242 = smul.addr %s241, 4
        %s243 = scalar_lea.vmem %s0, %s242
        %p244 = pneg %p42
        %p245 = pneg %p39
        %p246 = pneg %p63
        %p247 = pneg %p60
        %p248 = pneg %p84
        %p249 = pneg %p81
        %p250 = pneg %p105
        %p251 = pneg %p102
        %p252 = pneg %p126
        %p253 = pneg %p123
        %p254 = pneg %p147
        %p255 = pneg %p144
        %p256 = pneg %p173
        %p257 = pneg %p170
        %s258 = sand.u32 %s160, 1
        %s259 = scalar_lea.sflag [#allocation4], %s258
        %s260 = sand.u32 %s160, 1
        %s261 = smul.addr %s260, 128
        %s262 = scalar_lea.vmem [#allocation5], %s261
        %s263 = smul.u32 16, %s21
        %p264 = scmp.lt.s32.totalorder %s263, 31
        %s265 = scalar_select %p264, %s263, 31
        %s266 = smul.addr %s265, 4
        %s267 = scalar_lea.vmem %s0, %s266
        %s268 = smul.u32 16, %s21
        %s269 = smul.u32 16, %s21
        %v271 = vld [vmem:[%s267] sm:$0xf]
        %v272 = vld [vmem:[%s267 + $0x4] sm:$0xf]
        %v273 = vld [vmem:[%s267 + $0x8] sm:$0xf]
        %v274 = vld [vmem:[%s267 + $0xc] sm:$0xf]
        %v275 = vld [vmem:[%s267 + $0x10] sm:$0xf]
        %v276 = vld [vmem:[%s267 + $0x14] sm:$0xf]
        %v277 = vld [vmem:[%s267 + $0x18] sm:$0xf]
        %v278 = vld [vmem:[%s267 + $0x1c] sm:$0xf]
        %v279 = vld [vmem:[%s267 + $0x20] sm:$0xf]
        %v280 = vld [vmem:[%s267 + $0x24] sm:$0xf]
        %v281 = vld [vmem:[%s267 + $0x28] sm:$0xf]
        %v282 = vld [vmem:[%s267 + $0x2c] sm:$0xf]
        %v283 = vld [vmem:[%s267 + $0x30] sm:$0xf]
        %v284 = vld [vmem:[%s267 + $0x34] sm:$0xf]
        %v285 = vld [vmem:[%s267 + $0x38] sm:$0xf]
        %v286 = vld [vmem:[%s267 + $0x3c] sm:$0xf]
        %v287 = vld [vmem:[%s1] sm:$0xf]
        %v288 = vld [vmem:[%s1 + $0x4] sm:$0xf]
        %v289 = vld [vmem:[%s1 + $0x8] sm:$0xf]
        %v290 = vld [vmem:[%s1 + $0xc] sm:$0xf]
        %v291 = vld [vmem:[%s2] sm:$0x1]
        %v293 = vperm.slane %v291, 0
        %v311 = vunpack.c.l.b16 %v271
        %v312 = vunpack.c.l.b16 %v272
        %v313 = vunpack.c.l.b16 %v273
        %v314 = vunpack.c.l.b16 %v274
        %v315 = vunpack.c.l.b16 %v275
        %v316 = vunpack.c.l.b16 %v276
        %v317 = vunpack.c.l.b16 %v277
        %v318 = vunpack.c.l.b16 %v278
        %v319 = vunpack.c.l.b16 %v279
        %v320 = vunpack.c.l.b16 %v280
        %v321 = vunpack.c.l.b16 %v281
        %v322 = vunpack.c.l.b16 %v282
        %v323 = vunpack.c.l.b16 %v283
        %v324 = vunpack.c.l.b16 %v284
        %v325 = vunpack.c.l.b16 %v285
        %v326 = vunpack.c.l.b16 %v286
        %v327 = vpack.c.b16 %v312, %v311
        %v328 = vpack.c.b16 %v314, %v313
        %v329 = vpack.c.b16 %v316, %v315
        %v330 = vpack.c.b16 %v318, %v317
        %v331 = vpack.c.b16 %v320, %v319
        %v332 = vpack.c.b16 %v322, %v321
        %v333 = vpack.c.b16 %v324, %v323
        %v334 = vpack.c.b16 %v326, %v325
        %v339 = vunpack.c.l.b16 %v287
        %v340 = vunpack.c.l.b16 %v288
        %v341 = vunpack.c.l.b16 %v289
        %v342 = vunpack.c.l.b16 %v290
        %v343 = vpack.c.b16 %v340, %v339
        %v344 = vpack.c.b16 %v342, %v341
        %vm347 = vcmask 261120
        %v349 = vsel %vm347, %v327, 0
        %v352 = vsel %vm347, %v328, 0
        %v355 = vsel %vm347, %v329, 0
        %v358 = vsel %vm347, %v330, 0
        %v361 = vsel %vm347, %v331, 0
        %v364 = vsel %vm347, %v332, 0
        %v367 = vsel %vm347, %v333, 0
        %v370 = vsel %vm347, %v334, 0
        %372 = vmatpush.bf16.msra.mxu0 0
        %373 = vmatpush.bf16.msra.mxu0 0
        %374 = vmatpush.bf16.msra.mxu0 0
        %375 = vmatpush.bf16.msra.mxu0 0
        %376 = vmatpush.bf16.msra.mxu0 0
        %377 = vmatpush.bf16.msra.mxu0 0
        %378 = vmatpush.bf16.msra.mxu0 %v344
        %379 = vmatpush.bf16.msra.mxu0 %v343
        %380 = vmatmul.bf16.gmra.mxu0 %v349
        %v381 = vpop.f32.mrf.mxu0
        %v382 = vadd.f32 %v293, %v381
        %v383 = vpop.f32.mrf.mxu0
        %v384 = vadd.f32 %v293, %v383
        %385 = vmatmul.bf16.gmra.mxu0 %v352
        %v386 = vpop.f32.mrf.mxu0
        %v387 = vadd.f32 %v293, %v386
        %v388 = vpop.f32.mrf.mxu0
        %v389 = vadd.f32 %v293, %v388
        %390 = vmatmul.bf16.gmra.mxu0 %v355
        %v391 = vpop.f32.mrf.mxu0
        %v392 = vadd.f32 %v293, %v391
        %v393 = vpop.f32.mrf.mxu0
        %v394 = vadd.f32 %v293, %v393
        %395 = vmatmul.bf16.gmra.mxu0 %v358
        %v396 = vpop.f32.mrf.mxu0
        %v397 = vadd.f32 %v293, %v396
        %v398 = vpop.f32.mrf.mxu0
        %v399 = vadd.f32 %v293, %v398
        %400 = vmatmul.bf16.gmra.mxu0 %v361
        %v401 = vpop.f32.mrf.mxu0
        %v402 = vadd.f32 %v293, %v401
        %v403 = vpop.f32.mrf.mxu0
        %v404 = vadd.f32 %v293, %v403
        %405 = vmatmul.bf16.gmra.mxu0 %v364
        %v406 = vpop.f32.mrf.mxu0
        %v407 = vadd.f32 %v293, %v406
        %v408 = vpop.f32.mrf.mxu0
        %v409 = vadd.f32 %v293, %v408
        %410 = vmatmul.bf16.gmra.mxu0 %v367
        %v411 = vpop.f32.mrf.mxu0
        %v412 = vadd.f32 %v293, %v411
        %v413 = vpop.f32.mrf.mxu0
        %v414 = vadd.f32 %v293, %v413
        %415 = vmatmul.bf16.gmra.mxu0 %v370
        %v416 = vpop.f32.mrf.mxu0
        %v417 = vadd.f32 %v293, %v416
        %v418 = vpop.f32.mrf.mxu0
        %v419 = vadd.f32 %v293, %v418
        %420 = vdwg.mxu0
        %v421 = vpack.c.bf16 %v382, %v382
        %v422 = vpack.c.bf16 %v384, %v384
        %v423 = vpack.c.bf16 %v387, %v387
        %v424 = vpack.c.bf16 %v389, %v389
        %v425 = vpack.c.bf16 %v392, %v392
        %v426 = vpack.c.bf16 %v394, %v394
        %v427 = vpack.c.bf16 %v397, %v397
        %v428 = vpack.c.bf16 %v399, %v399
        %v429 = vpack.c.bf16 %v402, %v402
        %v430 = vpack.c.bf16 %v404, %v404
        %v431 = vpack.c.bf16 %v407, %v407
        %v432 = vpack.c.bf16 %v409, %v409
        %v433 = vpack.c.bf16 %v412, %v412
        %v434 = vpack.c.bf16 %v414, %v414
        %v435 = vpack.c.bf16 %v417, %v417
        %v436 = vpack.c.bf16 %v419, %v419
        %v437 = vld [vmem:[#allocation2] sm:$0xff]
        %v438 = vld [vmem:[#allocation2 + $0x8] sm:$0xff]
        %v439 = vld [vmem:[#allocation2 + $0x10] sm:$0xff]
        %v440 = vld [vmem:[#allocation2 + $0x18] sm:$0xff]
        %v441 = vld [vmem:[#allocation2 + $0x20] sm:$0xff]
        %v442 = vld [vmem:[#allocation2 + $0x28] sm:$0xff]
        %v443 = vld [vmem:[#allocation2 + $0x30] sm:$0xff]
        %v444 = vld [vmem:[#allocation2 + $0x38] sm:$0xff]
        %v445 = vld [vmem:[#allocation2 + $0x40] sm:$0xff]
        %v446 = vld [vmem:[#allocation2 + $0x48] sm:$0xff]
        %v447 = vld [vmem:[#allocation2 + $0x50] sm:$0xff]
        %v448 = vld [vmem:[#allocation2 + $0x58] sm:$0xff]
        %v449 = vld [vmem:[#allocation2 + $0x60] sm:$0xff]
        %v450 = vld [vmem:[#allocation2 + $0x68] sm:$0xff]
        %v451 = vld [vmem:[#allocation2 + $0x70] sm:$0xff]
        %v452 = vld [vmem:[#allocation2 + $0x78] sm:$0xff]
        %v469 = vunpack.c.l.b16 %v421
        %v470 = vunpack.c.l.b16 %v422
        %v471 = vunpack.c.l.b16 %v423
        %v472 = vunpack.c.l.b16 %v424
        %v473 = vunpack.c.l.b16 %v425
        %v474 = vunpack.c.l.b16 %v426
        %v475 = vunpack.c.l.b16 %v427
        %v476 = vunpack.c.l.b16 %v428
        %v477 = vunpack.c.l.b16 %v429
        %v478 = vunpack.c.l.b16 %v430
        %v479 = vunpack.c.l.b16 %v431
        %v480 = vunpack.c.l.b16 %v432
        %v481 = vunpack.c.l.b16 %v433
        %v482 = vunpack.c.l.b16 %v434
        %v483 = vunpack.c.l.b16 %v435
        %v484 = vunpack.c.l.b16 %v436
        %v485 = vpack.c.b16 %v470, %v469
        %v486 = vpack.c.b16 %v472, %v471
        %v487 = vpack.c.b16 %v474, %v473
        %v488 = vpack.c.b16 %v476, %v475
        %v489 = vpack.c.b16 %v478, %v477
        %v490 = vpack.c.b16 %v480, %v479
        %v491 = vpack.c.b16 %v482, %v481
        %v492 = vpack.c.b16 %v484, %v483
        %493 = vrot.lane.b32.xlu0 %v485, 112
        %v494 = vpop.permute.xlu0 %493
        %495 = vrot.lane.b32.xlu0 %v486, 112
        %v496 = vpop.permute.xlu0 %495
        %497 = vrot.lane.b32.xlu0 %v487, 112
        %v498 = vpop.permute.xlu0 %497
        %499 = vrot.lane.b32.xlu0 %v488, 112
        %v500 = vpop.permute.xlu0 %499
        %501 = vrot.lane.b32.xlu0 %v489, 112
        %v502 = vpop.permute.xlu0 %501
        %503 = vrot.lane.b32.xlu0 %v490, 112
        %v504 = vpop.permute.xlu0 %503
        %505 = vrot.lane.b32.xlu0 %v491, 112
        %v506 = vpop.permute.xlu0 %505
        %507 = vrot.lane.b32.xlu0 %v492, 112
        %v508 = vpop.permute.xlu0 %507
        %vm509 = vcmask 130048
        %v511 = vsel %vm509, %v485, 0
        %v514 = vsel %vm509, %v486, 0
        %v517 = vsel %vm509, %v487, 0
        %v520 = vsel %vm509, %v488, 0
        %v523 = vsel %vm509, %v489, 0
        %v526 = vsel %vm509, %v490, 0
        %v529 = vsel %vm509, %v491, 0
        %v532 = vsel %vm509, %v492, 0
        %v535 = vsel %vm509, %v494, 0
        %v538 = vsel %vm509, %v496, 0
        %v541 = vsel %vm509, %v498, 0
        %v544 = vsel %vm509, %v500, 0
        %v547 = vsel %vm509, %v502, 0
        %v550 = vsel %vm509, %v504, 0
        %v553 = vsel %vm509, %v506, 0
        %v556 = vsel %vm509, %v508, 0
        %558 = vmatpush.bf16.xpose.msra.mxu0 %v556
        %559 = vmatpush.bf16.xpose.msra.mxu0 %v553
        %560 = vmatpush.bf16.xpose.msra.mxu0 %v550
        %561 = vmatpush.bf16.xpose.msra.mxu0 %v547
        %562 = vmatpush.bf16.xpose.msra.mxu0 %v544
        %563 = vmatpush.bf16.xpose.msra.mxu0 %v541
        %564 = vmatpush.bf16.xpose.msra.mxu0 %v538
        %565 = vmatpush.bf16.xpose.msra.mxu0 %v535
        %566 = vmatmul.bf16.gmra.mxu0 %v511
        %v567 = vpop.f32.mrf.mxu0
        %v568 = vadd.f32 %v437, %v567
        %v569 = vpop.f32.mrf.mxu0
        %v570 = vadd.f32 %v438, %v569
        %571 = vmatmul.bf16.gmra.mxu0 %v514
        %v572 = vpop.f32.mrf.mxu0
        %v573 = vadd.f32 %v439, %v572
        %v574 = vpop.f32.mrf.mxu0
        %v575 = vadd.f32 %v440, %v574
        %576 = vmatmul.bf16.gmra.mxu0 %v517
        %v577 = vpop.f32.mrf.mxu0
        %v578 = vadd.f32 %v441, %v577
        %v579 = vpop.f32.mrf.mxu0
        %v580 = vadd.f32 %v442, %v579
        %581 = vmatmul.bf16.gmra.mxu0 %v520
        %v582 = vpop.f32.mrf.mxu0
        %v583 = vadd.f32 %v443, %v582
        %v584 = vpop.f32.mrf.mxu0
        %v585 = vadd.f32 %v444, %v584
        %586 = vmatmul.bf16.gmra.mxu0 %v523
        %v587 = vpop.f32.mrf.mxu0
        %v588 = vadd.f32 %v445, %v587
        %v589 = vpop.f32.mrf.mxu0
        %v590 = vadd.f32 %v446, %v589
        %591 = vmatmul.bf16.gmra.mxu0 %v526
        %v592 = vpop.f32.mrf.mxu0
        %v593 = vadd.f32 %v447, %v592
        %v594 = vpop.f32.mrf.mxu0
        %v595 = vadd.f32 %v448, %v594
        %596 = vmatmul.bf16.gmra.mxu0 %v529
        %v597 = vpop.f32.mrf.mxu0
        %v598 = vadd.f32 %v449, %v597
        %v599 = vpop.f32.mrf.mxu0
        %v600 = vadd.f32 %v450, %v599
        %601 = vmatmul.bf16.gmra.mxu0 %v532
        %v602 = vpop.f32.mrf.mxu0
        %v603 = vadd.f32 %v451, %v602
        %v604 = vpop.f32.mrf.mxu0
        %v605 = vadd.f32 %v452, %v604
        %606 = vdwg.mxu0
        %607 = vmax.xlane.f32.xlu0 %v568
        %v608 = vpop.xlane.xlu0 %607
        %609 = vmax.xlane.f32.xlu0 %v570
        %v610 = vpop.xlane.xlu0 %609
        %611 = vmax.xlane.f32.xlu0 %v573
        %v612 = vpop.xlane.xlu0 %611
        %613 = vmax.xlane.f32.xlu0 %v575
        %v614 = vpop.xlane.xlu0 %613
        %615 = vmax.xlane.f32.xlu0 %v578
        %v616 = vpop.xlane.xlu0 %615
        %617 = vmax.xlane.f32.xlu0 %v580
        %v618 = vpop.xlane.xlu0 %617
        %619 = vmax.xlane.f32.xlu0 %v583
        %v620 = vpop.xlane.xlu0 %619
        %621 = vmax.xlane.f32.xlu0 %v585
        %v622 = vpop.xlane.xlu0 %621
        %623 = vmax.xlane.f32.xlu0 %v588
        %v624 = vpop.xlane.xlu0 %623
        %625 = vmax.xlane.f32.xlu0 %v590
        %v626 = vpop.xlane.xlu0 %625
        %627 = vmax.xlane.f32.xlu0 %v593
        %v628 = vpop.xlane.xlu0 %627
        %629 = vmax.xlane.f32.xlu0 %v595
        %v630 = vpop.xlane.xlu0 %629
        %631 = vmax.xlane.f32.xlu0 %v598
        %v632 = vpop.xlane.xlu0 %631
        %633 = vmax.xlane.f32.xlu0 %v600
        %v634 = vpop.xlane.xlu0 %633
        %635 = vmax.xlane.f32.xlu0 %v603
        %v636 = vpop.xlane.xlu0 %635
        %637 = vmax.xlane.f32.xlu0 %v605
        %v638 = vpop.xlane.xlu0 %637
        %v639 = vsub.f32 %v568, %v608
        %v640 = vsub.f32 %v570, %v610
        %v641 = vsub.f32 %v573, %v612
        %v642 = vsub.f32 %v575, %v614
        %v643 = vsub.f32 %v578, %v616
        %v644 = vsub.f32 %v580, %v618
        %v645 = vsub.f32 %v583, %v620
        %v646 = vsub.f32 %v585, %v622
        %v647 = vsub.f32 %v588, %v624
        %v648 = vsub.f32 %v590, %v626
        %v649 = vsub.f32 %v593, %v628
        %v650 = vsub.f32 %v595, %v630
        %v651 = vsub.f32 %v598, %v632
        %v652 = vsub.f32 %v600, %v634
        %v653 = vsub.f32 %v603, %v636
        %v654 = vsub.f32 %v605, %v638
        %v655 = vmul.f32 %v639, 1.442695
        %v656 = vpow.pop %v655
        %v657 = vmul.f32 %v640, 1.442695
        %v658 = vpow.pop %v657
        %v659 = vmul.f32 %v641, 1.442695
        %v660 = vpow.pop %v659
        %v661 = vmul.f32 %v642, 1.442695
        %v662 = vpow.pop %v661
        %v663 = vmul.f32 %v643, 1.442695
        %v664 = vpow.pop %v663
        %v665 = vmul.f32 %v644, 1.442695
        %v666 = vpow.pop %v665
        %v667 = vmul.f32 %v645, 1.442695
        %v668 = vpow.pop %v667
        %v669 = vmul.f32 %v646, 1.442695
        %v670 = vpow.pop %v669
        %v671 = vmul.f32 %v647, 1.442695
        %v672 = vpow.pop %v671
        %v673 = vmul.f32 %v648, 1.442695
        %v674 = vpow.pop %v673
        %v675 = vmul.f32 %v649, 1.442695
        %v676 = vpow.pop %v675
        %v677 = vmul.f32 %v650, 1.442695
        %v678 = vpow.pop %v677
        %v679 = vmul.f32 %v651, 1.442695
        %v680 = vpow.pop %v679
        %v681 = vmul.f32 %v652, 1.442695
        %v682 = vpow.pop %v681
        %v683 = vmul.f32 %v653, 1.442695
        %v684 = vpow.pop %v683
        %v685 = vmul.f32 %v654, 1.442695
        %v686 = vpow.pop %v685
        %687 = vadd.xlane.f32.xlu0 %v656
        %v688 = vpop.xlane.xlu0 %687
        %689 = vadd.xlane.f32.xlu0 %v658
        %v690 = vpop.xlane.xlu0 %689
        %691 = vadd.xlane.f32.xlu0 %v660
        %v692 = vpop.xlane.xlu0 %691
        %693 = vadd.xlane.f32.xlu0 %v662
        %v694 = vpop.xlane.xlu0 %693
        %695 = vadd.xlane.f32.xlu0 %v664
        %v696 = vpop.xlane.xlu0 %695
        %697 = vadd.xlane.f32.xlu0 %v666
        %v698 = vpop.xlane.xlu0 %697
        %699 = vadd.xlane.f32.xlu0 %v668
        %v700 = vpop.xlane.xlu0 %699
        %701 = vadd.xlane.f32.xlu0 %v670
        %v702 = vpop.xlane.xlu0 %701
        %703 = vadd.xlane.f32.xlu0 %v672
        %v704 = vpop.xlane.xlu0 %703
        %705 = vadd.xlane.f32.xlu0 %v674
        %v706 = vpop.xlane.xlu0 %705
        %707 = vadd.xlane.f32.xlu0 %v676
        %v708 = vpop.xlane.xlu0 %707
        %709 = vadd.xlane.f32.xlu0 %v678
        %v710 = vpop.xlane.xlu0 %709
        %711 = vadd.xlane.f32.xlu0 %v680
        %v712 = vpop.xlane.xlu0 %711
        %713 = vadd.xlane.f32.xlu0 %v682
        %v714 = vpop.xlane.xlu0 %713
        %715 = vadd.xlane.f32.xlu0 %v684
        %v716 = vpop.xlane.xlu0 %715
        %717 = vadd.xlane.f32.xlu0 %v686
        %v718 = vpop.xlane.xlu0 %717
        %v719 = vrcp.pop %v688
        %v720 = vrcp.pop %v690
        %v721 = vrcp.pop %v692
        %v722 = vrcp.pop %v694
        %v723 = vrcp.pop %v696
        %v724 = vrcp.pop %v698
        %v725 = vrcp.pop %v700
        %v726 = vrcp.pop %v702
        %v727 = vrcp.pop %v704
        %v728 = vrcp.pop %v706
        %v729 = vrcp.pop %v708
        %v730 = vrcp.pop %v710
        %v731 = vrcp.pop %v712
        %v732 = vrcp.pop %v714
        %v733 = vrcp.pop %v716
        %v734 = vrcp.pop %v718
        %v735 = vmul.f32 %v656, %v719
        %v736 = vmul.f32 %v658, %v720
        %v737 = vmul.f32 %v660, %v721
        %v738 = vmul.f32 %v662, %v722
        %v739 = vmul.f32 %v664, %v723
        %v740 = vmul.f32 %v666, %v724
        %v741 = vmul.f32 %v668, %v725
        %v742 = vmul.f32 %v670, %v726
        %v743 = vmul.f32 %v672, %v727
        %v744 = vmul.f32 %v674, %v728
        %v745 = vmul.f32 %v676, %v729
        %v746 = vmul.f32 %v678, %v730
        %v747 = vmul.f32 %v680, %v731
        %v748 = vmul.f32 %v682, %v732
        %v749 = vmul.f32 %v684, %v733
        %v750 = vmul.f32 %v686, %v734
        %v751 = vpack.c.bf16 %v736, %v735
        %v752 = vpack.c.bf16 %v738, %v737
        %v753 = vpack.c.bf16 %v740, %v739
        %v754 = vpack.c.bf16 %v742, %v741
        %v755 = vpack.c.bf16 %v744, %v743
        %v756 = vpack.c.bf16 %v746, %v745
        %v757 = vpack.c.bf16 %v748, %v747
        %v758 = vpack.c.bf16 %v750, %v749
        %759 = vrot.lane.b32.xlu0 %v485, 96
        %v760 = vpop.permute.xlu0 %759
        %761 = vrot.lane.b32.xlu0 %v486, 96
        %v762 = vpop.permute.xlu0 %761
        %763 = vrot.lane.b32.xlu0 %v487, 96
        %v764 = vpop.permute.xlu0 %763
        %765 = vrot.lane.b32.xlu0 %v488, 96
        %v766 = vpop.permute.xlu0 %765
        %767 = vrot.lane.b32.xlu0 %v489, 96
        %v768 = vpop.permute.xlu0 %767
        %769 = vrot.lane.b32.xlu0 %v490, 96
        %v770 = vpop.permute.xlu0 %769
        %771 = vrot.lane.b32.xlu0 %v491, 96
        %v772 = vpop.permute.xlu0 %771
        %773 = vrot.lane.b32.xlu0 %v492, 96
        %v774 = vpop.permute.xlu0 %773
        %783 = vmatpush.bf16.msra.mxu0 %v774
        %784 = vmatpush.bf16.msra.mxu0 %v772
        %785 = vmatpush.bf16.msra.mxu0 %v770
        %786 = vmatpush.bf16.msra.mxu0 %v768
        %787 = vmatpush.bf16.msra.mxu0 %v766
        %788 = vmatpush.bf16.msra.mxu0 %v764
        %789 = vmatpush.bf16.msra.mxu0 %v762
        %790 = vmatpush.bf16.msra.mxu0 %v760
        %791 = vmatmul.bf16.gmra.mxu0 %v751
        %v792 = vpop.f32.mrf.mxu0
        %v793 = vadd.f32 0.0, %v792
        %v794 = vpop.f32.mrf.mxu0
        %v795 = vadd.f32 0.0, %v794
        %796 = vmatmul.bf16.gmra.mxu0 %v752
        %v797 = vpop.f32.mrf.mxu0
        %v798 = vadd.f32 0.0, %v797
        %v799 = vpop.f32.mrf.mxu0
        %v800 = vadd.f32 0.0, %v799
        %801 = vmatmul.bf16.gmra.mxu0 %v753
        %v802 = vpop.f32.mrf.mxu0
        %v803 = vadd.f32 0.0, %v802
        %v804 = vpop.f32.mrf.mxu0
        %v805 = vadd.f32 0.0, %v804
        %806 = vmatmul.bf16.gmra.mxu0 %v754
        %v807 = vpop.f32.mrf.mxu0
        %v808 = vadd.f32 0.0, %v807
        %v809 = vpop.f32.mrf.mxu0
        %v810 = vadd.f32 0.0, %v809
        %811 = vmatmul.bf16.gmra.mxu0 %v755
        %v812 = vpop.f32.mrf.mxu0
        %v813 = vadd.f32 0.0, %v812
        %v814 = vpop.f32.mrf.mxu0
        %v815 = vadd.f32 0.0, %v814
        %816 = vmatmul.bf16.gmra.mxu0 %v756
        %v817 = vpop.f32.mrf.mxu0
        %v818 = vadd.f32 0.0, %v817
        %v819 = vpop.f32.mrf.mxu0
        %v820 = vadd.f32 0.0, %v819
        %821 = vmatmul.bf16.gmra.mxu0 %v757
        %v822 = vpop.f32.mrf.mxu0
        %v823 = vadd.f32 0.0, %v822
        %v824 = vpop.f32.mrf.mxu0
        %v825 = vadd.f32 0.0, %v824
        %826 = vmatmul.bf16.gmra.mxu0 %v758
        %v827 = vpop.f32.mrf.mxu0
        %v828 = vadd.f32 0.0, %v827
        %v829 = vpop.f32.mrf.mxu0
        %v830 = vadd.f32 0.0, %v829
        %831 = vdwg.mxu0
        %v832 = vadd.f32 %v793, 3.0
        %v833 = vadd.f32 %v795, 3.0
        %v834 = vadd.f32 %v798, 3.0
        %v835 = vadd.f32 %v800, 3.0
        %v836 = vadd.f32 %v803, 3.0
        %v837 = vadd.f32 %v805, 3.0
        %v838 = vadd.f32 %v808, 3.0
        %v839 = vadd.f32 %v810, 3.0
        %v840 = vadd.f32 %v813, 3.0
        %v841 = vadd.f32 %v815, 3.0
        %v842 = vadd.f32 %v818, 3.0
        %v843 = vadd.f32 %v820, 3.0
        %v844 = vadd.f32 %v823, 3.0
        %v845 = vadd.f32 %v825, 3.0
        %v846 = vadd.f32 %v828, 3.0
        %v847 = vadd.f32 %v830, 3.0
        %v848 = vmax.f32 %v832, 0.0
        %v849 = vmax.f32 %v833, 0.0
        %v850 = vmax.f32 %v834, 0.0
        %v851 = vmax.f32 %v835, 0.0
        %v852 = vmax.f32 %v836, 0.0
        %v853 = vmax.f32 %v837, 0.0
        %v854 = vmax.f32 %v838, 0.0
        %v855 = vmax.f32 %v839, 0.0
        %v856 = vmax.f32 %v840, 0.0
        %v857 = vmax.f32 %v841, 0.0
        %v858 = vmax.f32 %v842, 0.0
        %v859 = vmax.f32 %v843, 0.0
        %v860 = vmax.f32 %v844, 0.0
        %v861 = vmax.f32 %v845, 0.0
        %v862 = vmax.f32 %v846, 0.0
        %v863 = vmax.f32 %v847, 0.0
        %v864 = vmin.f32 %v848, 6.0
        %v865 = vmin.f32 %v849, 6.0
        %v866 = vmin.f32 %v850, 6.0
        %v867 = vmin.f32 %v851, 6.0
        %v868 = vmin.f32 %v852, 6.0
        %v869 = vmin.f32 %v853, 6.0
        %v870 = vmin.f32 %v854, 6.0
        %v871 = vmin.f32 %v855, 6.0
        %v872 = vmin.f32 %v856, 6.0
        %v873 = vmin.f32 %v857, 6.0
        %v874 = vmin.f32 %v858, 6.0
        %v875 = vmin.f32 %v859, 6.0
        %v876 = vmin.f32 %v860, 6.0
        %v877 = vmin.f32 %v861, 6.0
        %v878 = vmin.f32 %v862, 6.0
        %v879 = vmin.f32 %v863, 6.0
        %v880 = vmul.f32 %v793, %v864
        %v881 = vmul.f32 %v795, %v865
        %v882 = vmul.f32 %v798, %v866
        %v883 = vmul.f32 %v800, %v867
        %v884 = vmul.f32 %v803, %v868
        %v885 = vmul.f32 %v805, %v869
        %v886 = vmul.f32 %v808, %v870
        %v887 = vmul.f32 %v810, %v871
        %v888 = vmul.f32 %v813, %v872
        %v889 = vmul.f32 %v815, %v873
        %v890 = vmul.f32 %v818, %v874
        %v891 = vmul.f32 %v820, %v875
        %v892 = vmul.f32 %v823, %v876
        %v893 = vmul.f32 %v825, %v877
        %v894 = vmul.f32 %v828, %v878
        %v895 = vmul.f32 %v830, %v879
        %v896 = vmul.f32 %v880, 0.16666667
        %v897 = vmul.f32 %v881, 0.16666667
        %v898 = vmul.f32 %v882, 0.16666667
        %v899 = vmul.f32 %v883, 0.16666667
        %v900 = vmul.f32 %v884, 0.16666667
        %v901 = vmul.f32 %v885, 0.16666667
        %v902 = vmul.f32 %v886, 0.16666667
        %v903 = vmul.f32 %v887, 0.16666667
        %v904 = vmul.f32 %v888, 0.16666667
        %v905 = vmul.f32 %v889, 0.16666667
        %v906 = vmul.f32 %v890, 0.16666667
        %v907 = vmul.f32 %v891, 0.16666667
        %v908 = vmul.f32 %v892, 0.16666667
        %v909 = vmul.f32 %v893, 0.16666667
        %v910 = vmul.f32 %v894, 0.16666667
        %v911 = vmul.f32 %v895, 0.16666667
        %v912 = vpack.c.bf16 %v897, %v896
        %v913 = vpack.c.bf16 %v899, %v898
        %v914 = vpack.c.bf16 %v901, %v900
        %v915 = vpack.c.bf16 %v903, %v902
        %v916 = vpack.c.bf16 %v905, %v904
        %v917 = vpack.c.bf16 %v907, %v906
        %v918 = vpack.c.bf16 %v909, %v908
        %v919 = vpack.c.bf16 %v911, %v910
        %v920 = vld [vmem:[%s4] sm:$0xf]
        %v921 = vld [vmem:[%s4 + $0x4] sm:$0xf]
        %v922 = vld [vmem:[%s4 + $0x8] sm:$0xf]
        %v923 = vld [vmem:[%s4 + $0xc] sm:$0xf]
        %s924 = scalar_lea.vmem [#allocation2], 128
        %v925 = vld [vmem:[%s924] sm:$0xff]
        %v926 = vld [vmem:[%s924 + $0x8] sm:$0xff]
        %v927 = vld [vmem:[%s924 + $0x10] sm:$0xff]
        %v928 = vld [vmem:[%s924 + $0x18] sm:$0xff]
        %v929 = vld [vmem:[%s924 + $0x20] sm:$0xff]
        %v930 = vld [vmem:[%s924 + $0x28] sm:$0xff]
        %v931 = vld [vmem:[%s924 + $0x30] sm:$0xff]
        %v932 = vld [vmem:[%s924 + $0x38] sm:$0xff]
        %v933 = vld [vmem:[%s924 + $0x40] sm:$0xff]
        %v934 = vld [vmem:[%s924 + $0x48] sm:$0xff]
        %v935 = vld [vmem:[%s924 + $0x50] sm:$0xff]
        %v936 = vld [vmem:[%s924 + $0x58] sm:$0xff]
        %v937 = vld [vmem:[%s924 + $0x60] sm:$0xff]
        %v938 = vld [vmem:[%s924 + $0x68] sm:$0xff]
        %v939 = vld [vmem:[%s924 + $0x70] sm:$0xff]
        %v940 = vld [vmem:[%s924 + $0x78] sm:$0xff]
        %941 = vrot.lane.b32.xlu0 %v485, 64
        %v942 = vpop.permute.xlu0 %941
        %943 = vrot.lane.b32.xlu0 %v486, 64
        %v944 = vpop.permute.xlu0 %943
        %945 = vrot.lane.b32.xlu0 %v487, 64
        %v946 = vpop.permute.xlu0 %945
        %947 = vrot.lane.b32.xlu0 %v488, 64
        %v948 = vpop.permute.xlu0 %947
        %949 = vrot.lane.b32.xlu0 %v489, 64
        %v950 = vpop.permute.xlu0 %949
        %951 = vrot.lane.b32.xlu0 %v490, 64
        %v952 = vpop.permute.xlu0 %951
        %953 = vrot.lane.b32.xlu0 %v491, 64
        %v954 = vpop.permute.xlu0 %953
        %955 = vrot.lane.b32.xlu0 %v492, 64
        %v956 = vpop.permute.xlu0 %955
        %957 = vrot.lane.b32.xlu0 %v485, 48
        %v958 = vpop.permute.xlu0 %957
        %959 = vrot.lane.b32.xlu0 %v486, 48
        %v960 = vpop.permute.xlu0 %959
        %961 = vrot.lane.b32.xlu0 %v487, 48
        %v962 = vpop.permute.xlu0 %961
        %963 = vrot.lane.b32.xlu0 %v488, 48
        %v964 = vpop.permute.xlu0 %963
        %965 = vrot.lane.b32.xlu0 %v489, 48
        %v966 = vpop.permute.xlu0 %965
        %967 = vrot.lane.b32.xlu0 %v490, 48
        %v968 = vpop.permute.xlu0 %967
        %969 = vrot.lane.b32.xlu0 %v491, 48
        %v970 = vpop.permute.xlu0 %969
        %971 = vrot.lane.b32.xlu0 %v492, 48
        %v972 = vpop.permute.xlu0 %971
        %v974 = vsel %vm509, %v942, 0
        %v977 = vsel %vm509, %v944, 0
        %v980 = vsel %vm509, %v946, 0
        %v983 = vsel %vm509, %v948, 0
        %v986 = vsel %vm509, %v950, 0
        %v989 = vsel %vm509, %v952, 0
        %v992 = vsel %vm509, %v954, 0
        %v995 = vsel %vm509, %v956, 0
        %v998 = vsel %vm509, %v958, 0
        %v1001 = vsel %vm509, %v960, 0
        %v1004 = vsel %vm509, %v962, 0
        %v1007 = vsel %vm509, %v964, 0
        %v1010 = vsel %vm509, %v966, 0
        %v1013 = vsel %vm509, %v968, 0
        %v1016 = vsel %vm509, %v970, 0
        %v1019 = vsel %vm509, %v972, 0
        %1021 = vmatpush.bf16.xpose.msra.mxu0 %v1019
        %1022 = vmatpush.bf16.xpose.msra.mxu0 %v1016
        %1023 = vmatpush.bf16.xpose.msra.mxu0 %v1013
        %1024 = vmatpush.bf16.xpose.msra.mxu0 %v1010
        %1025 = vmatpush.bf16.xpose.msra.mxu0 %v1007
        %1026 = vmatpush.bf16.xpose.msra.mxu0 %v1004
        %1027 = vmatpush.bf16.xpose.msra.mxu0 %v1001
        %1028 = vmatpush.bf16.xpose.msra.mxu0 %v998
        %1029 = vmatmul.bf16.gmra.mxu0 %v974
        %v1030 = vpop.f32.mrf.mxu0
        %v1031 = vadd.f32 %v925, %v1030
        %v1032 = vpop.f32.mrf.mxu0
        %v1033 = vadd.f32 %v926, %v1032
        %1034 = vmatmul.bf16.gmra.mxu0 %v977
        %v1035 = vpop.f32.mrf.mxu0
        %v1036 = vadd.f32 %v927, %v1035
        %v1037 = vpop.f32.mrf.mxu0
        %v1038 = vadd.f32 %v928, %v1037
        %1039 = vmatmul.bf16.gmra.mxu0 %v980
        %v1040 = vpop.f32.mrf.mxu0
        %v1041 = vadd.f32 %v929, %v1040
        %v1042 = vpop.f32.mrf.mxu0
        %v1043 = vadd.f32 %v930, %v1042
        %1044 = vmatmul.bf16.gmra.mxu0 %v983
        %v1045 = vpop.f32.mrf.mxu0
        %v1046 = vadd.f32 %v931, %v1045
        %v1047 = vpop.f32.mrf.mxu0
        %v1048 = vadd.f32 %v932, %v1047
        %1049 = vmatmul.bf16.gmra.mxu0 %v986
        %v1050 = vpop.f32.mrf.mxu0
        %v1051 = vadd.f32 %v933, %v1050
        %v1052 = vpop.f32.mrf.mxu0
        %v1053 = vadd.f32 %v934, %v1052
        %1054 = vmatmul.bf16.gmra.mxu0 %v989
        %v1055 = vpop.f32.mrf.mxu0
        %v1056 = vadd.f32 %v935, %v1055
        %v1057 = vpop.f32.mrf.mxu0
        %v1058 = vadd.f32 %v936, %v1057
        %1059 = vmatmul.bf16.gmra.mxu0 %v992
        %v1060 = vpop.f32.mrf.mxu0
        %v1061 = vadd.f32 %v937, %v1060
        %v1062 = vpop.f32.mrf.mxu0
        %v1063 = vadd.f32 %v938, %v1062
        %1064 = vmatmul.bf16.gmra.mxu0 %v995
        %v1065 = vpop.f32.mrf.mxu0
        %v1066 = vadd.f32 %v939, %v1065
        %v1067 = vpop.f32.mrf.mxu0
        %v1068 = vadd.f32 %v940, %v1067
        %1069 = vdwg.mxu0
        %1070 = vmax.xlane.f32.xlu0 %v1031
        %v1071 = vpop.xlane.xlu0 %1070
        %1072 = vmax.xlane.f32.xlu0 %v1033
        %v1073 = vpop.xlane.xlu0 %1072
        %1074 = vmax.xlane.f32.xlu0 %v1036
        %v1075 = vpop.xlane.xlu0 %1074
        %1076 = vmax.xlane.f32.xlu0 %v1038
        %v1077 = vpop.xlane.xlu0 %1076
        %1078 = vmax.xlane.f32.xlu0 %v1041
        %v1079 = vpop.xlane.xlu0 %1078
        %1080 = vmax.xlane.f32.xlu0 %v1043
        %v1081 = vpop.xlane.xlu0 %1080
        %1082 = vmax.xlane.f32.xlu0 %v1046
        %v1083 = vpop.xlane.xlu0 %1082
        %1084 = vmax.xlane.f32.xlu0 %v1048
        %v1085 = vpop.xlane.xlu0 %1084
        %1086 = vmax.xlane.f32.xlu0 %v1051
        %v1087 = vpop.xlane.xlu0 %1086
        %1088 = vmax.xlane.f32.xlu0 %v1053
        %v1089 = vpop.xlane.xlu0 %1088
        %1090 = vmax.xlane.f32.xlu0 %v1056
        %v1091 = vpop.xlane.xlu0 %1090
        %1092 = vmax.xlane.f32.xlu0 %v1058
        %v1093 = vpop.xlane.xlu0 %1092
        %1094 = vmax.xlane.f32.xlu0 %v1061
        %v1095 = vpop.xlane.xlu0 %1094
        %1096 = vmax.xlane.f32.xlu0 %v1063
        %v1097 = vpop.xlane.xlu0 %1096
        %1098 = vmax.xlane.f32.xlu0 %v1066
        %v1099 = vpop.xlane.xlu0 %1098
        %1100 = vmax.xlane.f32.xlu0 %v1068
        %v1101 = vpop.xlane.xlu0 %1100
        %v1102 = vsub.f32 %v1031, %v1071
        %v1103 = vsub.f32 %v1033, %v1073
        %v1104 = vsub.f32 %v1036, %v1075
        %v1105 = vsub.f32 %v1038, %v1077
        %v1106 = vsub.f32 %v1041, %v1079
        %v1107 = vsub.f32 %v1043, %v1081
        %v1108 = vsub.f32 %v1046, %v1083
        %v1109 = vsub.f32 %v1048, %v1085
        %v1110 = vsub.f32 %v1051, %v1087
        %v1111 = vsub.f32 %v1053, %v1089
        %v1112 = vsub.f32 %v1056, %v1091
        %v1113 = vsub.f32 %v1058, %v1093
        %v1114 = vsub.f32 %v1061, %v1095
        %v1115 = vsub.f32 %v1063, %v1097
        %v1116 = vsub.f32 %v1066, %v1099
        %v1117 = vsub.f32 %v1068, %v1101
        %v1118 = vmul.f32 %v1102, 1.442695
        %v1119 = vpow.pop %v1118
        %v1120 = vmul.f32 %v1103, 1.442695
        %v1121 = vpow.pop %v1120
        %v1122 = vmul.f32 %v1104, 1.442695
        %v1123 = vpow.pop %v1122
        %v1124 = vmul.f32 %v1105, 1.442695
        %v1125 = vpow.pop %v1124
        %v1126 = vmul.f32 %v1106, 1.442695
        %v1127 = vpow.pop %v1126
        %v1128 = vmul.f32 %v1107, 1.442695
        %v1129 = vpow.pop %v1128
        %v1130 = vmul.f32 %v1108, 1.442695
        %v1131 = vpow.pop %v1130
        %v1132 = vmul.f32 %v1109, 1.442695
        %v1133 = vpow.pop %v1132
        %v1134 = vmul.f32 %v1110, 1.442695
        %v1135 = vpow.pop %v1134
        %v1136 = vmul.f32 %v1111, 1.442695
        %v1137 = vpow.pop %v1136
        %v1138 = vmul.f32 %v1112, 1.442695
        %v1139 = vpow.pop %v1138
        %v1140 = vmul.f32 %v1113, 1.442695
        %v1141 = vpow.pop %v1140
        %v1142 = vmul.f32 %v1114, 1.442695
        %v1143 = vpow.pop %v1142
        %v1144 = vmul.f32 %v1115, 1.442695
        %v1145 = vpow.pop %v1144
        %v1146 = vmul.f32 %v1116, 1.442695
        %v1147 = vpow.pop %v1146
        %v1148 = vmul.f32 %v1117, 1.442695
        %v1149 = vpow.pop %v1148
        %1150 = vadd.xlane.f32.xlu0 %v1119
        %v1151 = vpop.xlane.xlu0 %1150
        %1152 = vadd.xlane.f32.xlu0 %v1121
        %v1153 = vpop.xlane.xlu0 %1152
        %1154 = vadd.xlane.f32.xlu0 %v1123
        %v1155 = vpop.xlane.xlu0 %1154
        %1156 = vadd.xlane.f32.xlu0 %v1125
        %v1157 = vpop.xlane.xlu0 %1156
        %1158 = vadd.xlane.f32.xlu0 %v1127
        %v1159 = vpop.xlane.xlu0 %1158
        %1160 = vadd.xlane.f32.xlu0 %v1129
        %v1161 = vpop.xlane.xlu0 %1160
        %1162 = vadd.xlane.f32.xlu0 %v1131
        %v1163 = vpop.xlane.xlu0 %1162
        %1164 = vadd.xlane.f32.xlu0 %v1133
        %v1165 = vpop.xlane.xlu0 %1164
        %1166 = vadd.xlane.f32.xlu0 %v1135
        %v1167 = vpop.xlane.xlu0 %1166
        %1168 = vadd.xlane.f32.xlu0 %v1137
        %v1169 = vpop.xlane.xlu0 %1168
        %1170 = vadd.xlane.f32.xlu0 %v1139
        %v1171 = vpop.xlane.xlu0 %1170
        %1172 = vadd.xlane.f32.xlu0 %v1141
        %v1173 = vpop.xlane.xlu0 %1172
        %1174 = vadd.xlane.f32.xlu0 %v1143
        %v1175 = vpop.xlane.xlu0 %1174
        %1176 = vadd.xlane.f32.xlu0 %v1145
        %v1177 = vpop.xlane.xlu0 %1176
        %1178 = vadd.xlane.f32.xlu0 %v1147
        %v1179 = vpop.xlane.xlu0 %1178
        %1180 = vadd.xlane.f32.xlu0 %v1149
        %v1181 = vpop.xlane.xlu0 %1180
        %v1182 = vrcp.pop %v1151
        %v1183 = vrcp.pop %v1153
        %v1184 = vrcp.pop %v1155
        %v1185 = vrcp.pop %v1157
        %v1186 = vrcp.pop %v1159
        %v1187 = vrcp.pop %v1161
        %v1188 = vrcp.pop %v1163
        %v1189 = vrcp.pop %v1165
        %v1190 = vrcp.pop %v1167
        %v1191 = vrcp.pop %v1169
        %v1192 = vrcp.pop %v1171
        %v1193 = vrcp.pop %v1173
        %v1194 = vrcp.pop %v1175
        %v1195 = vrcp.pop %v1177
        %v1196 = vrcp.pop %v1179
        %v1197 = vrcp.pop %v1181
        %v1198 = vmul.f32 %v1119, %v1182
        %v1199 = vmul.f32 %v1121, %v1183
        %v1200 = vmul.f32 %v1123, %v1184
        %v1201 = vmul.f32 %v1125, %v1185
        %v1202 = vmul.f32 %v1127, %v1186
        %v1203 = vmul.f32 %v1129, %v1187
        %v1204 = vmul.f32 %v1131, %v1188
        %v1205 = vmul.f32 %v1133, %v1189
        %v1206 = vmul.f32 %v1135, %v1190
        %v1207 = vmul.f32 %v1137, %v1191
        %v1208 = vmul.f32 %v1139, %v1192
        %v1209 = vmul.f32 %v1141, %v1193
        %v1210 = vmul.f32 %v1143, %v1194
        %v1211 = vmul.f32 %v1145, %v1195
        %v1212 = vmul.f32 %v1147, %v1196
        %v1213 = vmul.f32 %v1149, %v1197
        %v1214 = vpack.c.bf16 %v1199, %v1198
        %v1215 = vpack.c.bf16 %v1201, %v1200
        %v1216 = vpack.c.bf16 %v1203, %v1202
        %v1217 = vpack.c.bf16 %v1205, %v1204
        %v1218 = vpack.c.bf16 %v1207, %v1206
        %v1219 = vpack.c.bf16 %v1209, %v1208
        %v1220 = vpack.c.bf16 %v1211, %v1210
        %v1221 = vpack.c.bf16 %v1213, %v1212
        %1222 = vrot.lane.b32.xlu0 %v485, 32
        %v1223 = vpop.permute.xlu0 %1222
        %1224 = vrot.lane.b32.xlu0 %v486, 32
        %v1225 = vpop.permute.xlu0 %1224
        %1226 = vrot.lane.b32.xlu0 %v487, 32
        %v1227 = vpop.permute.xlu0 %1226
        %1228 = vrot.lane.b32.xlu0 %v488, 32
        %v1229 = vpop.permute.xlu0 %1228
        %1230 = vrot.lane.b32.xlu0 %v489, 32
        %v1231 = vpop.permute.xlu0 %1230
        %1232 = vrot.lane.b32.xlu0 %v490, 32
        %v1233 = vpop.permute.xlu0 %1232
        %1234 = vrot.lane.b32.xlu0 %v491, 32
        %v1235 = vpop.permute.xlu0 %1234
        %1236 = vrot.lane.b32.xlu0 %v492, 32
        %v1237 = vpop.permute.xlu0 %1236
        %1246 = vmatpush.bf16.msra.mxu0 %v1237
        %1247 = vmatpush.bf16.msra.mxu0 %v1235
        %1248 = vmatpush.bf16.msra.mxu0 %v1233
        %1249 = vmatpush.bf16.msra.mxu0 %v1231
        %1250 = vmatpush.bf16.msra.mxu0 %v1229
        %1251 = vmatpush.bf16.msra.mxu0 %v1227
        %1252 = vmatpush.bf16.msra.mxu0 %v1225
        %1253 = vmatpush.bf16.msra.mxu0 %v1223
        %1254 = vmatmul.bf16.gmra.mxu0 %v1214
        %v1255 = vpop.f32.mrf.mxu0
        %v1256 = vadd.f32 0.0, %v1255
        %v1257 = vpop.f32.mrf.mxu0
        %v1258 = vadd.f32 0.0, %v1257
        %1259 = vmatmul.bf16.gmra.mxu0 %v1215
        %v1260 = vpop.f32.mrf.mxu0
        %v1261 = vadd.f32 0.0, %v1260
        %v1262 = vpop.f32.mrf.mxu0
        %v1263 = vadd.f32 0.0, %v1262
        %1264 = vmatmul.bf16.gmra.mxu0 %v1216
        %v1265 = vpop.f32.mrf.mxu0
        %v1266 = vadd.f32 0.0, %v1265
        %v1267 = vpop.f32.mrf.mxu0
        %v1268 = vadd.f32 0.0, %v1267
        %1269 = vmatmul.bf16.gmra.mxu0 %v1217
        %v1270 = vpop.f32.mrf.mxu0
        %v1271 = vadd.f32 0.0, %v1270
        %v1272 = vpop.f32.mrf.mxu0
        %v1273 = vadd.f32 0.0, %v1272
        %1274 = vmatmul.bf16.gmra.mxu0 %v1218
        %v1275 = vpop.f32.mrf.mxu0
        %v1276 = vadd.f32 0.0, %v1275
        %v1277 = vpop.f32.mrf.mxu0
        %v1278 = vadd.f32 0.0, %v1277
        %1279 = vmatmul.bf16.gmra.mxu0 %v1219
        %v1280 = vpop.f32.mrf.mxu0
        %v1281 = vadd.f32 0.0, %v1280
        %v1282 = vpop.f32.mrf.mxu0
        %v1283 = vadd.f32 0.0, %v1282
        %1284 = vmatmul.bf16.gmra.mxu0 %v1220
        %v1285 = vpop.f32.mrf.mxu0
        %v1286 = vadd.f32 0.0, %v1285
        %v1287 = vpop.f32.mrf.mxu0
        %v1288 = vadd.f32 0.0, %v1287
        %1289 = vmatmul.bf16.gmra.mxu0 %v1221
        %v1290 = vpop.f32.mrf.mxu0
        %v1291 = vadd.f32 0.0, %v1290
        %v1292 = vpop.f32.mrf.mxu0
        %v1293 = vadd.f32 0.0, %v1292
        %1294 = vdwg.mxu0
        %v1295 = vadd.f32 %v1256, 3.0
        %v1296 = vadd.f32 %v1258, 3.0
        %v1297 = vadd.f32 %v1261, 3.0
        %v1298 = vadd.f32 %v1263, 3.0
        %v1299 = vadd.f32 %v1266, 3.0
        %v1300 = vadd.f32 %v1268, 3.0
        %v1301 = vadd.f32 %v1271, 3.0
        %v1302 = vadd.f32 %v1273, 3.0
        %v1303 = vadd.f32 %v1276, 3.0
        %v1304 = vadd.f32 %v1278, 3.0
        %v1305 = vadd.f32 %v1281, 3.0
        %v1306 = vadd.f32 %v1283, 3.0
        %v1307 = vadd.f32 %v1286, 3.0
        %v1308 = vadd.f32 %v1288, 3.0
        %v1309 = vadd.f32 %v1291, 3.0
        %v1310 = vadd.f32 %v1293, 3.0
        %v1311 = vmax.f32 %v1295, 0.0
        %v1312 = vmax.f32 %v1296, 0.0
        %v1313 = vmax.f32 %v1297, 0.0
        %v1314 = vmax.f32 %v1298, 0.0
        %v1315 = vmax.f32 %v1299, 0.0
        %v1316 = vmax.f32 %v1300, 0.0
        %v1317 = vmax.f32 %v1301, 0.0
        %v1318 = vmax.f32 %v1302, 0.0
        %v1319 = vmax.f32 %v1303, 0.0
        %v1320 = vmax.f32 %v1304, 0.0
        %v1321 = vmax.f32 %v1305, 0.0
        %v1322 = vmax.f32 %v1306, 0.0
        %v1323 = vmax.f32 %v1307, 0.0
        %v1324 = vmax.f32 %v1308, 0.0
        %v1325 = vmax.f32 %v1309, 0.0
        %v1326 = vmax.f32 %v1310, 0.0
        %v1327 = vmin.f32 %v1311, 6.0
        %v1328 = vmin.f32 %v1312, 6.0
        %v1329 = vmin.f32 %v1313, 6.0
        %v1330 = vmin.f32 %v1314, 6.0
        %v1331 = vmin.f32 %v1315, 6.0
        %v1332 = vmin.f32 %v1316, 6.0
        %v1333 = vmin.f32 %v1317, 6.0
        %v1334 = vmin.f32 %v1318, 6.0
        %v1335 = vmin.f32 %v1319, 6.0
        %v1336 = vmin.f32 %v1320, 6.0
        %v1337 = vmin.f32 %v1321, 6.0
        %v1338 = vmin.f32 %v1322, 6.0
        %v1339 = vmin.f32 %v1323, 6.0
        %v1340 = vmin.f32 %v1324, 6.0
        %v1341 = vmin.f32 %v1325, 6.0
        %v1342 = vmin.f32 %v1326, 6.0
        %v1343 = vmul.f32 %v1256, %v1327
        %v1344 = vmul.f32 %v1258, %v1328
        %v1345 = vmul.f32 %v1261, %v1329
        %v1346 = vmul.f32 %v1263, %v1330
        %v1347 = vmul.f32 %v1266, %v1331
        %v1348 = vmul.f32 %v1268, %v1332
        %v1349 = vmul.f32 %v1271, %v1333
        %v1350 = vmul.f32 %v1273, %v1334
        %v1351 = vmul.f32 %v1276, %v1335
        %v1352 = vmul.f32 %v1278, %v1336
        %v1353 = vmul.f32 %v1281, %v1337
        %v1354 = vmul.f32 %v1283, %v1338
        %v1355 = vmul.f32 %v1286, %v1339
        %v1356 = vmul.f32 %v1288, %v1340
        %v1357 = vmul.f32 %v1291, %v1341
        %v1358 = vmul.f32 %v1293, %v1342
        %v1359 = vmul.f32 %v1343, 0.16666667
        %v1360 = vmul.f32 %v1344, 0.16666667
        %v1361 = vmul.f32 %v1345, 0.16666667
        %v1362 = vmul.f32 %v1346, 0.16666667
        %v1363 = vmul.f32 %v1347, 0.16666667
        %v1364 = vmul.f32 %v1348, 0.16666667
        %v1365 = vmul.f32 %v1349, 0.16666667
        %v1366 = vmul.f32 %v1350, 0.16666667
        %v1367 = vmul.f32 %v1351, 0.16666667
        %v1368 = vmul.f32 %v1352, 0.16666667
        %v1369 = vmul.f32 %v1353, 0.16666667
        %v1370 = vmul.f32 %v1354, 0.16666667
        %v1371 = vmul.f32 %v1355, 0.16666667
        %v1372 = vmul.f32 %v1356, 0.16666667
        %v1373 = vmul.f32 %v1357, 0.16666667
        %v1374 = vmul.f32 %v1358, 0.16666667
        %v1375 = vpack.c.bf16 %v1360, %v1359
        %v1376 = vpack.c.bf16 %v1362, %v1361
        %v1377 = vpack.c.bf16 %v1364, %v1363
        %v1378 = vpack.c.bf16 %v1366, %v1365
        %v1379 = vpack.c.bf16 %v1368, %v1367
        %v1380 = vpack.c.bf16 %v1370, %v1369
        %v1381 = vpack.c.bf16 %v1372, %v1371
        %v1382 = vpack.c.bf16 %v1374, %v1373
        %s1383 = scalar_lea.vmem %s4, 16
        %v1384 = vld [vmem:[%s1383] sm:$0xf]
        %v1385 = vld [vmem:[%s1383 + $0x4] sm:$0xf]
        %v1386 = vld [vmem:[%s1383 + $0x8] sm:$0xf]
        %v1387 = vld [vmem:[%s1383 + $0xc] sm:$0xf]
        %v1392 = vunpack.c.l.b16 %v1384
        %v1393 = vunpack.c.l.b16 %v1385
        %v1394 = vunpack.c.l.b16 %v1386
        %v1395 = vunpack.c.l.b16 %v1387
        %v1396 = vpack.c.b16 %v1393, %v1392
        %v1397 = vpack.c.b16 %v1395, %v1394
        %v1401 = vsel %vm347, %v1375, 0
        %v1404 = vsel %vm347, %v1376, 0
        %v1407 = vsel %vm347, %v1377, 0
        %v1410 = vsel %vm347, %v1378, 0
        %v1413 = vsel %vm347, %v1379, 0
        %v1416 = vsel %vm347, %v1380, 0
        %v1419 = vsel %vm347, %v1381, 0
        %v1422 = vsel %vm347, %v1382, 0
        %1424 = vmatpush.bf16.msra.mxu0 0
        %1425 = vmatpush.bf16.msra.mxu0 0
        %1426 = vmatpush.bf16.msra.mxu0 0
        %1427 = vmatpush.bf16.msra.mxu0 0
        %1428 = vmatpush.bf16.msra.mxu0 0
        %1429 = vmatpush.bf16.msra.mxu0 0
        %1430 = vmatpush.bf16.msra.mxu0 %v1397
        %1431 = vmatpush.bf16.msra.mxu0 %v1396
        %1432 = vmatmul.bf16.gmra.mxu0 %v1401
        %v1433 = vpop.f32.mrf.mxu0
        %v1434 = vadd.f32 0.0, %v1433
        %v1435 = vpop.f32.mrf.mxu0
        %v1436 = vadd.f32 0.0, %v1435
        %1437 = vmatmul.bf16.gmra.mxu0 %v1404
        %v1438 = vpop.f32.mrf.mxu0
        %v1439 = vadd.f32 0.0, %v1438
        %v1440 = vpop.f32.mrf.mxu0
        %v1441 = vadd.f32 0.0, %v1440
        %1442 = vmatmul.bf16.gmra.mxu0 %v1407
        %v1443 = vpop.f32.mrf.mxu0
        %v1444 = vadd.f32 0.0, %v1443
        %v1445 = vpop.f32.mrf.mxu0
        %v1446 = vadd.f32 0.0, %v1445
        %1447 = vmatmul.bf16.gmra.mxu0 %v1410
        %v1448 = vpop.f32.mrf.mxu0
        %v1449 = vadd.f32 0.0, %v1448
        %v1450 = vpop.f32.mrf.mxu0
        %v1451 = vadd.f32 0.0, %v1450
        %1452 = vmatmul.bf16.gmra.mxu0 %v1413
        %v1453 = vpop.f32.mrf.mxu0
        %v1454 = vadd.f32 0.0, %v1453
        %v1455 = vpop.f32.mrf.mxu0
        %v1456 = vadd.f32 0.0, %v1455
        %1457 = vmatmul.bf16.gmra.mxu0 %v1416
        %v1458 = vpop.f32.mrf.mxu0
        %v1459 = vadd.f32 0.0, %v1458
        %v1460 = vpop.f32.mrf.mxu0
        %v1461 = vadd.f32 0.0, %v1460
        %1462 = vmatmul.bf16.gmra.mxu0 %v1419
        %v1463 = vpop.f32.mrf.mxu0
        %v1464 = vadd.f32 0.0, %v1463
        %v1465 = vpop.f32.mrf.mxu0
        %v1466 = vadd.f32 0.0, %v1465
        %1467 = vmatmul.bf16.gmra.mxu0 %v1422
        %v1468 = vpop.f32.mrf.mxu0
        %v1469 = vadd.f32 0.0, %v1468
        %v1470 = vpop.f32.mrf.mxu0
        %v1471 = vadd.f32 0.0, %v1470
        %1472 = vdwg.mxu0
        %v1477 = vunpack.c.l.b16 %v920
        %v1478 = vunpack.c.l.b16 %v921
        %v1479 = vunpack.c.l.b16 %v922
        %v1480 = vunpack.c.l.b16 %v923
        %v1481 = vpack.c.b16 %v1478, %v1477
        %v1482 = vpack.c.b16 %v1480, %v1479
        %v1486 = vsel %vm347, %v912, 0
        %v1489 = vsel %vm347, %v913, 0
        %v1492 = vsel %vm347, %v914, 0
        %v1495 = vsel %vm347, %v915, 0
        %v1498 = vsel %vm347, %v916, 0
        %v1501 = vsel %vm347, %v917, 0
        %v1504 = vsel %vm347, %v918, 0
        %v1507 = vsel %vm347, %v919, 0
        %1509 = vmatpush.bf16.msra.mxu0 0
        %1510 = vmatpush.bf16.msra.mxu0 0
        %1511 = vmatpush.bf16.msra.mxu0 0
        %1512 = vmatpush.bf16.msra.mxu0 0
        %1513 = vmatpush.bf16.msra.mxu0 0
        %1514 = vmatpush.bf16.msra.mxu0 0
        %1515 = vmatpush.bf16.msra.mxu0 %v1482
        %1516 = vmatpush.bf16.msra.mxu0 %v1481
        %1517 = vmatmul.bf16.gmra.mxu0 %v1486
        %v1518 = vpop.f32.mrf.mxu0
        %v1519 = vadd.f32 %v1434, %v1518
        %v1520 = vpop.f32.mrf.mxu0
        %v1521 = vadd.f32 %v1436, %v1520
        %1522 = vmatmul.bf16.gmra.mxu0 %v1489
        %v1523 = vpop.f32.mrf.mxu0
        %v1524 = vadd.f32 %v1439, %v1523
        %v1525 = vpop.f32.mrf.mxu0
        %v1526 = vadd.f32 %v1441, %v1525
        %1527 = vmatmul.bf16.gmra.mxu0 %v1492
        %v1528 = vpop.f32.mrf.mxu0
        %v1529 = vadd.f32 %v1444, %v1528
        %v1530 = vpop.f32.mrf.mxu0
        %v1531 = vadd.f32 %v1446, %v1530
        %1532 = vmatmul.bf16.gmra.mxu0 %v1495
        %v1533 = vpop.f32.mrf.mxu0
        %v1534 = vadd.f32 %v1449, %v1533
        %v1535 = vpop.f32.mrf.mxu0
        %v1536 = vadd.f32 %v1451, %v1535
        %1537 = vmatmul.bf16.gmra.mxu0 %v1498
        %v1538 = vpop.f32.mrf.mxu0
        %v1539 = vadd.f32 %v1454, %v1538
        %v1540 = vpop.f32.mrf.mxu0
        %v1541 = vadd.f32 %v1456, %v1540
        %1542 = vmatmul.bf16.gmra.mxu0 %v1501
        %v1543 = vpop.f32.mrf.mxu0
        %v1544 = vadd.f32 %v1459, %v1543
        %v1545 = vpop.f32.mrf.mxu0
        %v1546 = vadd.f32 %v1461, %v1545
        %1547 = vmatmul.bf16.gmra.mxu0 %v1504
        %v1548 = vpop.f32.mrf.mxu0
        %v1549 = vadd.f32 %v1464, %v1548
        %v1550 = vpop.f32.mrf.mxu0
        %v1551 = vadd.f32 %v1466, %v1550
        %1552 = vmatmul.bf16.gmra.mxu0 %v1507
        %v1553 = vpop.f32.mrf.mxu0
        %v1554 = vadd.f32 %v1469, %v1553
        %v1555 = vpop.f32.mrf.mxu0
        %v1556 = vadd.f32 %v1471, %v1555
        %1557 = vdwg.mxu0
        %v1558 = vld [vmem:[%s5] sm:$0x1]
        %v1560 = vperm.slane %v1558, 0
        %v1562 = vadd.f32 %v1519, %v1560
        %v1563 = vadd.f32 %v1521, %v1560
        %v1564 = vadd.f32 %v1524, %v1560
        %v1565 = vadd.f32 %v1526, %v1560
        %v1566 = vadd.f32 %v1529, %v1560
        %v1567 = vadd.f32 %v1531, %v1560
        %v1568 = vadd.f32 %v1534, %v1560
        %v1569 = vadd.f32 %v1536, %v1560
        %v1570 = vadd.f32 %v1539, %v1560
        %v1571 = vadd.f32 %v1541, %v1560
        %v1572 = vadd.f32 %v1544, %v1560
        %v1573 = vadd.f32 %v1546, %v1560
        %v1574 = vadd.f32 %v1549, %v1560
        %v1575 = vadd.f32 %v1551, %v1560
        %v1576 = vadd.f32 %v1554, %v1560
        %v1577 = vadd.f32 %v1556, %v1560
        %1578 = vst [vmem:[%s262] sm:$0xff] %v1562
        %1579 = vst [vmem:[%s262 + $0x8] sm:$0xff] %v1563
        %1580 = vst [vmem:[%s262 + $0x10] sm:$0xff] %v1564
        %1581 = vst [vmem:[%s262 + $0x18] sm:$0xff] %v1565
        %1582 = vst [vmem:[%s262 + $0x20] sm:$0xff] %v1566
        %1583 = vst [vmem:[%s262 + $0x28] sm:$0xff] %v1567
        %1584 = vst [vmem:[%s262 + $0x30] sm:$0xff] %v1568
        %1585 = vst [vmem:[%s262 + $0x38] sm:$0xff] %v1569
        %1586 = vst [vmem:[%s262 + $0x40] sm:$0xff] %v1570
        %1587 = vst [vmem:[%s262 + $0x48] sm:$0xff] %v1571
        %1588 = vst [vmem:[%s262 + $0x50] sm:$0xff] %v1572
        %1589 = vst [vmem:[%s262 + $0x58] sm:$0xff] %v1573
        %1590 = vst [vmem:[%s262 + $0x60] sm:$0xff] %v1574
        %1591 = vst [vmem:[%s262 + $0x68] sm:$0xff] %v1575
        %1592 = vst [vmem:[%s262 + $0x70] sm:$0xff] %v1576
        %1593 = vst [vmem:[%s262 + $0x78] sm:$0xff] %v1577
        %s1594 = sand.u32 %s160, 1
        %s1595 = scalar_lea.sflag [#allocation4], %s1594
        %s1596 = sand.u32 %s160, 1
        %s1597 = smul.addr %s1596, 128
        %s1598 = scalar_lea.vmem [#allocation5], %s1597
        // Predicated region
        $region49: #{tpu_custom_call.1} parent=43 // pred_check
          %p1599 = pneg %p170
        $region50: #{tpu_custom_call.1} parent=43 // pred_check_branch
          %1601 = sbr.rel (%p1599) target = $region52
        $region51: #{tpu_custom_call.1} parent=43 // pred_region
          %s1602 = smul.u32 16, %s21
          %1604 = vsyncadd %s1595, 0
          %s1605 = smul.addr %s1602, 8
          %s1606 = scalar_lea.hbm %s6, %s1605
          %s1607 = sshll.u32 %s1598, 4
          %s1608 = int_to_ptr.vmem [resolvable:$true] %s1607
          %s1609 = sshll.u32 %s1606, 4
          %s1610 = int_to_ptr.hbm [resolvable:$true] %s1609
          %1615 = dma.vmem_to_hbm [thread:$0]  %s1608, 2048, %s1610, %s1595, 128, 128, 8
        $region52: #{tpu_custom_call.1} parent=43 // pred_fallthru
          _
      $region44: #{tpu_custom_call.1} parent=5 // pred_fallthru
        _
      %p1616 = scmp.le.s32.totalorder 2, %s16
      // Predicated region
      $region53: #{tpu_custom_call.1} parent=5 // pred_check
        %p1617 = pneg %p1616
      $region54: #{tpu_custom_call.1} parent=5 // pred_check_branch
        %1619 = sbr.rel (%p1617) target = $region56
      $region55: #{tpu_custom_call.1} parent=5 // pred_region
        %s1620 = ssub.s32 %s16, 2
        // Predicated region
        $region57: #{tpu_custom_call.1} parent=55 // pred_check
          %p1621 = pneg %p176
        $region58: #{tpu_custom_call.1} parent=55 // pred_check_branch
          %1623 = sbr.rel (%p1621) target = $region60
        $region59: #{tpu_custom_call.1} parent=55 // pred_region
          %s1624 = sand.u32 %s161, 1
          %s1625 = scalar_lea.sflag [#allocation4], %s1624
          %s1626 = sand.u32 %s161, 1
          %s1627 = smul.addr %s1626, 128
          %s1628 = scalar_lea.vmem [#allocation5], %s1627
          %1630 = dma.done %s1625, 2048
        $region60: #{tpu_custom_call.1} parent=55 // pred_fallthru
          _
      $region56: #{tpu_custom_call.1} parent=5 // pred_fallthru
        _
    $region6: #{tpu_custom_call.1} parent=1 // loop_footer
      %s20 = sadd.s32 1, %s16
    $region7: #{tpu_custom_call.1} parent=1 // loop_footer_branch
      %15 = sbr.rel target = $region3
    $region8: #{tpu_custom_call.1} parent=1 // loop_exit
      _
    %1631 = vsyncpa [#allocation3], 1
    %s1632 = scalar_lea.sflag [#allocation3], 1
    %1633 = vsyncpa %s1632, 1
    %1634 = vsyncpa [#allocation4], 1
    %s1635 = scalar_lea.sflag [#allocation4], 1
    %1636 = vsyncpa %s1635, 1

</llo_original>
